<compile_context>
chip_gen: v7x
topology: tpu7x:2x2x1
jax: 0.10.0
libtpu: 0.0.40
codegen_flags: <defaults>
</compile_context>

<pallas_src>
import functools

import jax
import jax.numpy as jnp
from jax.experimental import pallas as pl
from jax.experimental.pallas import tpu as pltpu


def _lstm_head_kernel(xg_ref, wih0_ref, whh0_ref, b0_ref,
                      wih1_ref, whh1_ref, b1_ref, wlin_ref, blin_ref,
                      out_ref, *, hidden_dim, seq_len, batch):
    """Whole-sequence 2-layer LSTM + Linear + ReLU, single grid point."""
    H, T, B = hidden_dim, seq_len, batch
    f32 = jnp.float32
    bf16 = jnp.bfloat16

    # Hoisted layer-0 input projection (+ folded bias): ONE MXU matmul for all
    # timesteps. Time-major layout -> row t*B + b holds (batch b, step t).
    g0_all = (jnp.dot(xg_ref[...], wih0_ref[...], preferred_element_type=f32)
              + b0_ref[...])                              # (T*B, 4H) f32

    # Hoist the layer-1 bias broadcast once (JAX does not CSE broadcast_in_dim).
    b1b = jnp.broadcast_to(b1_ref[...], (B, 4 * H))

    def gates_to_hc(g, c_prev):
        # Full-width sigmoid covers the i/f/o slices (3 of 4); tanh is
        # narrowed to the g slice only to save EUP pushes on the serial chain.
        # PyTorch gate order is [i, f, g, o].
        sig = jax.nn.sigmoid(g)
        i = sig[:, 0 * H:1 * H]
        f = sig[:, 1 * H:2 * H]
        o = sig[:, 3 * H:4 * H]
        gg = jnp.tanh(g[:, 2 * H:3 * H])
        c = f * c_prev + i * gg
        h = o * jnp.tanh(c)
        return h, c

    zeros = jnp.zeros((B, H), f32)
    h0 = c0 = h1 = c1 = zeros
    # Recurrent layer-1 contribution for the *next* step; h1_{-1} = 0.
    g1_hh = jnp.zeros((B, 4 * H), f32)

    # Statically unrolled recurrence (T small & fixed). Weight refs are
    # indexed at each dot site so they are not pinned in vregs across steps,
    # letting the scheduler wavefront the layer-0 / layer-1 MXU+EUP chains.
    for t in range(T):
        # Layer 0: input projection already done; one recurrent dot on the
        # critical path. The gate slab is a contiguous B-row static slice.
        g0 = g0_all[t * B:(t + 1) * B, :] + jnp.dot(
            h0.astype(bf16), whh0_ref[...], preferred_element_type=f32)
        h0, c0 = gates_to_hc(g0, c0)

        # Layer 1: h1 @ W_hh1 was issued at the end of the previous step
        # (off the serial chain); only h0 @ W_ih1 waits on h0.
        g1 = (jnp.dot(h0.astype(bf16), wih1_ref[...],
                      preferred_element_type=f32) + g1_hh + b1b)
        h1, c1 = gates_to_hc(g1, c1)

        if t + 1 < T:
            # Issue next step's recurrent dot immediately so its MXU push
            # overlaps the next step's layer-0 chain.
            g1_hh = jnp.dot(h1.astype(bf16), whh1_ref[...],
                            preferred_element_type=f32)

    # Linear + ReLU head on h_n[-1] (128-lane dense store).
    y = (jnp.dot(h1.astype(bf16), wlin_ref[...], preferred_element_type=f32)
         + blin_ref[...])
    out_ref[...] = jnp.maximum(y, 0.0).astype(out_ref.dtype)


@functools.partial(jax.jit, static_argnames=("hidden_dim", "output_dim"))
def rnn_for_stacked_features(x, kparams, *, hidden_dim, output_dim):
    """x: (B, T, D) batch-first float32. Returns (B, output_dim) float32."""
    B, T, D = x.shape
    # Time-major (T*B, D) so per-step gate slabs are contiguous sublane rows;
    # the transpose is tiny and happens once, off the serial recurrence.
    x_tm = jnp.transpose(x, (1, 0, 2)).reshape(T * B, D).astype(jnp.bfloat16)

    kernel = functools.partial(_lstm_head_kernel, hidden_dim=hidden_dim,
                               seq_len=T, batch=B)
    vmem = lambda: pl.BlockSpec(memory_space=pltpu.MemorySpace.VMEM)

    # Total resident data is well under 0.5 MiB: whole-array VMEM specs and a
    # single grid point are correct on v5e/v6e/v7x at these shapes.
    return pl.pallas_call(
        kernel,
        out_shape=jax.ShapeDtypeStruct((B, output_dim), jnp.float32),
        in_specs=[vmem() for _ in range(9)],
        out_specs=vmem(),
    )(x_tm,
      kparams["w_ih0"], kparams["w_hh0"], kparams["b0"],
      kparams["w_ih1"], kparams["w_hh1"], kparams["b1"],
      kparams["w_lin"], kparams["b_lin"])


def init_params(key, input_dim, hidden_dim, output_dim):
    """Deterministic synthetic params (PyTorch-shaped, transposed, f32)."""
    H = hidden_dim
    ks = jax.random.split(key, 10)
    s_rnn = 1.0 / jnp.sqrt(H)
    s_lin = 1.0 / jnp.sqrt(H)

    def u(k, shape, s):
        return jax.random.uniform(k, shape, jnp.float32, -s, s)

    # PyTorch LSTM params: weight_ih_l{k} (4H, in), weight_hh_l{k} (4H, H),
    # bias_ih_l{k} (4H,), bias_hh_l{k} (4H,). Fold both biases together and
    # transpose weights for `state @ W` matmuls.
    w_ih0 = u(ks[0], (4 * H, input_dim), s_rnn)
    w_hh0 = u(ks[1], (4 * H, H), s_rnn)
    b_ih0 = u(ks[2], (4 * H,), s_rnn)
    b_hh0 = u(ks[3], (4 * H,), s_rnn)
    w_ih1 = u(ks[4], (4 * H, H), s_rnn)
    w_hh1 = u(ks[5], (4 * H, H), s_rnn)
    b_ih1 = u(ks[6], (4 * H,), s_rnn)
    b_hh1 = u(ks[7], (4 * H,), s_rnn)
    w_lin = u(ks[8], (output_dim, H), s_lin)   # nn.Linear weight (out, in)
    b_lin = u(ks[9], (output_dim,), s_lin)

    return {
        "w_ih0": w_ih0.T, "w_hh0": w_hh0.T, "b0": (b_ih0 + b_hh0)[None, :],
        "w_ih1": w_ih1.T, "w_hh1": w_hh1.T, "b1": (b_ih1 + b_hh1)[None, :],
        "w_lin": w_lin.T, "b_lin": b_lin[None, :],
    }


def prepare_kernel_params(params):
    """One-time prep: cast MXU weight operands to bf16 (f32 accumulate
    happens in-kernel); biases stay f32. Done once, outside the jitted call."""
    bf16 = jnp.bfloat16
    return {
        "w_ih0": params["w_ih0"].astype(bf16),
        "w_hh0": params["w_hh0"].astype(bf16),
        "w_ih1": params["w_ih1"].astype(bf16),
        "w_hh1": params["w_hh1"].astype(bf16),
        "w_lin": params["w_lin"].astype(bf16),
        "b0": params["b0"],
        "b1": params["b1"],
        "b_lin": params["b_lin"],
    }


def reference_forward(x, params, *, hidden_dim):
    """Pure-JAX f32 reference of the same forward pass (for verification)."""
    H = hidden_dim
    B, T, _ = x.shape
    h0 = c0 = h1 = c1 = jnp.zeros((B, H), jnp.float32)

    def gates_to_hc(g, c_prev):
        i = jax.nn.sigmoid(g[:, 0 * H:1 * H])
        f = jax.nn.sigmoid(g[:, 1 * H:2 * H])
        gg = jnp.tanh(g[:, 2 * H:3 * H])
        o = jax.nn.sigmoid(g[:, 3 * H:4 * H])
        c = f * c_prev + i * gg
        return o * jnp.tanh(c), c

    for t in range(T):
        x_t = x[:, t, :]
        g0 = x_t @ params["w_ih0"] + h0 @ params["w_hh0"] + params["b0"]
        h0, c0 = gates_to_hc(g0, c0)
        g1 = h0 @ params["w_ih1"] + h1 @ params["w_hh1"] + params["b1"]
        h1, c1 = gates_to_hc(g1, c1)

    return jnp.maximum(h1 @ params["w_lin"] + params["b_lin"], 0.0)


if __name__ == "__main__":
    # Small shapes consistent with the module's forward (module defaults:
    # hidden_dim=64, num_layers=2, output_dim=128), batch=4, seq=8, D=16.
    B, T, D = 4, 8, 16
    HIDDEN, OUT = 64, 128

    key = jax.random.PRNGKey(0)
    kx, kp = jax.random.split(key)
    x = jax.random.normal(kx, (B, T, D), jnp.float32)
    params = init_params(kp, D, HIDDEN, OUT)
    kparams = prepare_kernel_params(params)   # one-time weight prep

    out = rnn_for_stacked_features(x, kparams, hidden_dim=HIDDEN,
                                   output_dim=OUT)
    out = jax.block_until_ready(out)

    ref = reference_forward(x, params, hidden_dim=HIDDEN)
    assert out.shape == (B, OUT), out.shape
    # bf16 MXU operands (kernel) vs f32-default-precision dots (reference):
    # both go through the MXU at bf16, so the delta is a couple of ulps.
    assert jnp.allclose(out, ref, rtol=5e-3, atol=5e-3), (
        float(jnp.max(jnp.abs(out - ref))))

    print("KERNEL_OK")
</pallas_src>

<mosaic_0001>
module attributes {stable_mosaic.version = 11 : i64} {
  func.func @_lstm_head_kernel(%arg0: memref<32x16xbf16, #tpu.memory_space<vmem>>, %arg1: memref<16x256xbf16, #tpu.memory_space<vmem>>, %arg2: memref<64x256xbf16, #tpu.memory_space<vmem>>, %arg3: memref<1x256xf32, #tpu.memory_space<vmem>>, %arg4: memref<64x256xbf16, #tpu.memory_space<vmem>>, %arg5: memref<64x256xbf16, #tpu.memory_space<vmem>>, %arg6: memref<1x256xf32, #tpu.memory_space<vmem>>, %arg7: memref<64x128xbf16, #tpu.memory_space<vmem>>, %arg8: memref<1x128xf32, #tpu.memory_space<vmem>>, %arg9: memref<4x128xf32, #tpu.memory_space<vmem>>) attributes {dimension_semantics = [], scalar_prefetch = 0 : i64, scratch_operands = 0 : i64, tpu.core_type = #tpu.core_type<tc>} {
    %c0 = arith.constant 0 : index
    %c0_0 = arith.constant 0 : index
    %0 = vector.load %arg0[%c0, %c0_0] : memref<32x16xbf16, #tpu.memory_space<vmem>>, vector<32x16xbf16>
    %c0_1 = arith.constant 0 : index
    %c0_2 = arith.constant 0 : index
    %1 = vector.load %arg1[%c0_1, %c0_2] : memref<16x256xbf16, #tpu.memory_space<vmem>>, vector<16x256xbf16>
    %cst = arith.constant dense<0.000000e+00> : vector<32x256xf32>
    %2 = tpu.matmul %0, %1, %cst {dimension_numbers = #tpu.dot_dimension_numbers<[1], [0], [0], [1], [0, 0, 1, 1], [], []>} : vector<32x16xbf16>, vector<16x256xbf16>, vector<32x256xf32> -> vector<32x256xf32>
    %c0_3 = arith.constant 0 : index
    %c0_4 = arith.constant 0 : index
    %3 = vector.load %arg3[%c0_3, %c0_4] : memref<1x256xf32, #tpu.memory_space<vmem>>, vector<1x256xf32>
    %4 = vector.broadcast %3 : vector<1x256xf32> to vector<32x256xf32>
    %5 = arith.addf %2, %4 : vector<32x256xf32>
    %c0_5 = arith.constant 0 : index
    %c0_6 = arith.constant 0 : index
    %6 = vector.load %arg6[%c0_5, %c0_6] : memref<1x256xf32, #tpu.memory_space<vmem>>, vector<1x256xf32>
    %7 = vector.shape_cast %6 : vector<1x256xf32> to vector<1x256xf32>
    %8 = vector.broadcast %7 : vector<1x256xf32> to vector<4x256xf32>
    %cst_7 = arith.constant 0.000000e+00 : f32
    %9 = vector.broadcast %cst_7 : f32 to vector<4x64xf32>
    %cst_8 = arith.constant 0.000000e+00 : f32
    %10 = vector.broadcast %cst_8 : f32 to vector<4x256xf32>
    %11 = vector.extract_strided_slice %5 {offsets = [0, 0], sizes = [4, 256], strides = [1, 1]} : vector<32x256xf32> to vector<4x256xf32>
    %12 = arith.truncf %9 : vector<4x64xf32> to vector<4x64xbf16>
    %c0_9 = arith.constant 0 : index
    %c0_10 = arith.constant 0 : index
    %13 = vector.load %arg2[%c0_9, %c0_10] : memref<64x256xbf16, #tpu.memory_space<vmem>>, vector<64x256xbf16>
    %cst_11 = arith.constant dense<0.000000e+00> : vector<4x256xf32>
    %14 = tpu.matmul %12, %13, %cst_11 {dimension_numbers = #tpu.dot_dimension_numbers<[1], [0], [0], [1], [0, 0, 1, 1], [], []>} : vector<4x64xbf16>, vector<64x256xbf16>, vector<4x256xf32> -> vector<4x256xf32>
    %15 = arith.addf %11, %14 : vector<4x256xf32>
    %16 = arith.negf %15 : vector<4x256xf32>
    %17 = math.exp %16 : vector<4x256xf32>
    %cst_12 = arith.constant 1.000000e+00 : f32
    %18 = vector.broadcast %cst_12 : f32 to vector<4x256xf32>
    %19 = arith.addf %18, %17 : vector<4x256xf32>
    %20 = arith.divf %18, %19 : vector<4x256xf32>
    %21 = vector.extract_strided_slice %20 {offsets = [0, 0], sizes = [4, 64], strides = [1, 1]} : vector<4x256xf32> to vector<4x64xf32>
    %22 = vector.extract_strided_slice %20 {offsets = [0, 64], sizes = [4, 64], strides = [1, 1]} : vector<4x256xf32> to vector<4x64xf32>
    %23 = vector.extract_strided_slice %20 {offsets = [0, 192], sizes = [4, 64], strides = [1, 1]} : vector<4x256xf32> to vector<4x64xf32>
    %24 = vector.extract_strided_slice %15 {offsets = [0, 128], sizes = [4, 64], strides = [1, 1]} : vector<4x256xf32> to vector<4x64xf32>
    %25 = math.tanh %24 : vector<4x64xf32>
    %26 = arith.mulf %22, %9 : vector<4x64xf32>
    %27 = arith.mulf %21, %25 : vector<4x64xf32>
    %28 = arith.addf %26, %27 : vector<4x64xf32>
    %29 = math.tanh %28 : vector<4x64xf32>
    %30 = arith.mulf %23, %29 : vector<4x64xf32>
    %31 = arith.truncf %30 : vector<4x64xf32> to vector<4x64xbf16>
    %c0_13 = arith.constant 0 : index
    %c0_14 = arith.constant 0 : index
    %32 = vector.load %arg4[%c0_13, %c0_14] : memref<64x256xbf16, #tpu.memory_space<vmem>>, vector<64x256xbf16>
    %cst_15 = arith.constant dense<0.000000e+00> : vector<4x256xf32>
    %33 = tpu.matmul %31, %32, %cst_15 {dimension_numbers = #tpu.dot_dimension_numbers<[1], [0], [0], [1], [0, 0, 1, 1], [], []>} : vector<4x64xbf16>, vector<64x256xbf16>, vector<4x256xf32> -> vector<4x256xf32>
    %34 = arith.addf %33, %10 : vector<4x256xf32>
    %35 = arith.addf %34, %8 : vector<4x256xf32>
    %36 = arith.negf %35 : vector<4x256xf32>
    %37 = math.exp %36 : vector<4x256xf32>
    %cst_16 = arith.constant 1.000000e+00 : f32
    %38 = vector.broadcast %cst_16 : f32 to vector<4x256xf32>
    %39 = arith.addf %38, %37 : vector<4x256xf32>
    %40 = arith.divf %38, %39 : vector<4x256xf32>
    %41 = vector.extract_strided_slice %40 {offsets = [0, 0], sizes = [4, 64], strides = [1, 1]} : vector<4x256xf32> to vector<4x64xf32>
    %42 = vector.extract_strided_slice %40 {offsets = [0, 64], sizes = [4, 64], strides = [1, 1]} : vector<4x256xf32> to vector<4x64xf32>
    %43 = vector.extract_strided_slice %40 {offsets = [0, 192], sizes = [4, 64], strides = [1, 1]} : vector<4x256xf32> to vector<4x64xf32>
    %44 = vector.extract_strided_slice %35 {offsets = [0, 128], sizes = [4, 64], strides = [1, 1]} : vector<4x256xf32> to vector<4x64xf32>
    %45 = math.tanh %44 : vector<4x64xf32>
    %46 = arith.mulf %42, %9 : vector<4x64xf32>
    %47 = arith.mulf %41, %45 : vector<4x64xf32>
    %48 = arith.addf %46, %47 : vector<4x64xf32>
    %49 = math.tanh %48 : vector<4x64xf32>
    %50 = arith.mulf %43, %49 : vector<4x64xf32>
    %51 = arith.truncf %50 : vector<4x64xf32> to vector<4x64xbf16>
    %c0_17 = arith.constant 0 : index
    %c0_18 = arith.constant 0 : index
    %52 = vector.load %arg5[%c0_17, %c0_18] : memref<64x256xbf16, #tpu.memory_space<vmem>>, vector<64x256xbf16>
    %cst_19 = arith.constant dense<0.000000e+00> : vector<4x256xf32>
    %53 = tpu.matmul %51, %52, %cst_19 {dimension_numbers = #tpu.dot_dimension_numbers<[1], [0], [0], [1], [0, 0, 1, 1], [], []>} : vector<4x64xbf16>, vector<64x256xbf16>, vector<4x256xf32> -> vector<4x256xf32>
    %54 = vector.extract_strided_slice %5 {offsets = [4, 0], sizes = [4, 256], strides = [1, 1]} : vector<32x256xf32> to vector<4x256xf32>
    %55 = arith.truncf %30 : vector<4x64xf32> to vector<4x64xbf16>
    %c0_20 = arith.constant 0 : index
    %c0_21 = arith.constant 0 : index
    %56 = vector.load %arg2[%c0_20, %c0_21] : memref<64x256xbf16, #tpu.memory_space<vmem>>, vector<64x256xbf16>
    %cst_22 = arith.constant dense<0.000000e+00> : vector<4x256xf32>
    %57 = tpu.matmul %55, %56, %cst_22 {dimension_numbers = #tpu.dot_dimension_numbers<[1], [0], [0], [1], [0, 0, 1, 1], [], []>} : vector<4x64xbf16>, vector<64x256xbf16>, vector<4x256xf32> -> vector<4x256xf32>
    %58 = arith.addf %54, %57 : vector<4x256xf32>
    %59 = arith.negf %58 : vector<4x256xf32>
    %60 = math.exp %59 : vector<4x256xf32>
    %cst_23 = arith.constant 1.000000e+00 : f32
    %61 = vector.broadcast %cst_23 : f32 to vector<4x256xf32>
    %62 = arith.addf %61, %60 : vector<4x256xf32>
    %63 = arith.divf %61, %62 : vector<4x256xf32>
    %64 = vector.extract_strided_slice %63 {offsets = [0, 0], sizes = [4, 64], strides = [1, 1]} : vector<4x256xf32> to vector<4x64xf32>
    %65 = vector.extract_strided_slice %63 {offsets = [0, 64], sizes = [4, 64], strides = [1, 1]} : vector<4x256xf32> to vector<4x64xf32>
    %66 = vector.extract_strided_slice %63 {offsets = [0, 192], sizes = [4, 64], strides = [1, 1]} : vector<4x256xf32> to vector<4x64xf32>
    %67 = vector.extract_strided_slice %58 {offsets = [0, 128], sizes = [4, 64], strides = [1, 1]} : vector<4x256xf32> to vector<4x64xf32>
    %68 = math.tanh %67 : vector<4x64xf32>
    %69 = arith.mulf %65, %28 : vector<4x64xf32>
    %70 = arith.mulf %64, %68 : vector<4x64xf32>
    %71 = arith.addf %69, %70 : vector<4x64xf32>
    %72 = math.tanh %71 : vector<4x64xf32>
    %73 = arith.mulf %66, %72 : vector<4x64xf32>
    %74 = arith.truncf %73 : vector<4x64xf32> to vector<4x64xbf16>
    %c0_24 = arith.constant 0 : index
    %c0_25 = arith.constant 0 : index
    %75 = vector.load %arg4[%c0_24, %c0_25] : memref<64x256xbf16, #tpu.memory_space<vmem>>, vector<64x256xbf16>
    %cst_26 = arith.constant dense<0.000000e+00> : vector<4x256xf32>
    %76 = tpu.matmul %74, %75, %cst_26 {dimension_numbers = #tpu.dot_dimension_numbers<[1], [0], [0], [1], [0, 0, 1, 1], [], []>} : vector<4x64xbf16>, vector<64x256xbf16>, vector<4x256xf32> -> vector<4x256xf32>
    %77 = arith.addf %76, %53 : vector<4x256xf32>
    %78 = arith.addf %77, %8 : vector<4x256xf32>
    %79 = arith.negf %78 : vector<4x256xf32>
    %80 = math.exp %79 : vector<4x256xf32>
    %cst_27 = arith.constant 1.000000e+00 : f32
    %81 = vector.broadcast %cst_27 : f32 to vector<4x256xf32>
    %82 = arith.addf %81, %80 : vector<4x256xf32>
    %83 = arith.divf %81, %82 : vector<4x256xf32>
    %84 = vector.extract_strided_slice %83 {offsets = [0, 0], sizes = [4, 64], strides = [1, 1]} : vector<4x256xf32> to vector<4x64xf32>
    %85 = vector.extract_strided_slice %83 {offsets = [0, 64], sizes = [4, 64], strides = [1, 1]} : vector<4x256xf32> to vector<4x64xf32>
    %86 = vector.extract_strided_slice %83 {offsets = [0, 192], sizes = [4, 64], strides = [1, 1]} : vector<4x256xf32> to vector<4x64xf32>
    %87 = vector.extract_strided_slice %78 {offsets = [0, 128], sizes = [4, 64], strides = [1, 1]} : vector<4x256xf32> to vector<4x64xf32>
    %88 = math.tanh %87 : vector<4x64xf32>
    %89 = arith.mulf %85, %48 : vector<4x64xf32>
    %90 = arith.mulf %84, %88 : vector<4x64xf32>
    %91 = arith.addf %89, %90 : vector<4x64xf32>
    %92 = math.tanh %91 : vector<4x64xf32>
    %93 = arith.mulf %86, %92 : vector<4x64xf32>
    %94 = arith.truncf %93 : vector<4x64xf32> to vector<4x64xbf16>
    %c0_28 = arith.constant 0 : index
    %c0_29 = arith.constant 0 : index
    %95 = vector.load %arg5[%c0_28, %c0_29] : memref<64x256xbf16, #tpu.memory_space<vmem>>, vector<64x256xbf16>
    %cst_30 = arith.constant dense<0.000000e+00> : vector<4x256xf32>
    %96 = tpu.matmul %94, %95, %cst_30 {dimension_numbers = #tpu.dot_dimension_numbers<[1], [0], [0], [1], [0, 0, 1, 1], [], []>} : vector<4x64xbf16>, vector<64x256xbf16>, vector<4x256xf32> -> vector<4x256xf32>
    %97 = vector.extract_strided_slice %5 {offsets = [8, 0], sizes = [4, 256], strides = [1, 1]} : vector<32x256xf32> to vector<4x256xf32>
    %98 = arith.truncf %73 : vector<4x64xf32> to vector<4x64xbf16>
    %c0_31 = arith.constant 0 : index
    %c0_32 = arith.constant 0 : index
    %99 = vector.load %arg2[%c0_31, %c0_32] : memref<64x256xbf16, #tpu.memory_space<vmem>>, vector<64x256xbf16>
    %cst_33 = arith.constant dense<0.000000e+00> : vector<4x256xf32>
    %100 = tpu.matmul %98, %99, %cst_33 {dimension_numbers = #tpu.dot_dimension_numbers<[1], [0], [0], [1], [0, 0, 1, 1], [], []>} : vector<4x64xbf16>, vector<64x256xbf16>, vector<4x256xf32> -> vector<4x256xf32>
    %101 = arith.addf %97, %100 : vector<4x256xf32>
    %102 = arith.negf %101 : vector<4x256xf32>
    %103 = math.exp %102 : vector<4x256xf32>
    %cst_34 = arith.constant 1.000000e+00 : f32
    %104 = vector.broadcast %cst_34 : f32 to vector<4x256xf32>
    %105 = arith.addf %104, %103 : vector<4x256xf32>
    %106 = arith.divf %104, %105 : vector<4x256xf32>
    %107 = vector.extract_strided_slice %106 {offsets = [0, 0], sizes = [4, 64], strides = [1, 1]} : vector<4x256xf32> to vector<4x64xf32>
    %108 = vector.extract_strided_slice %106 {offsets = [0, 64], sizes = [4, 64], strides = [1, 1]} : vector<4x256xf32> to vector<4x64xf32>
    %109 = vector.extract_strided_slice %106 {offsets = [0, 192], sizes = [4, 64], strides = [1, 1]} : vector<4x256xf32> to vector<4x64xf32>
    %110 = vector.extract_strided_slice %101 {offsets = [0, 128], sizes = [4, 64], strides = [1, 1]} : vector<4x256xf32> to vector<4x64xf32>
    %111 = math.tanh %110 : vector<4x64xf32>
    %112 = arith.mulf %108, %71 : vector<4x64xf32>
    %113 = arith.mulf %107, %111 : vector<4x64xf32>
    %114 = arith.addf %112, %113 : vector<4x64xf32>
    %115 = math.tanh %114 : vector<4x64xf32>
    %116 = arith.mulf %109, %115 : vector<4x64xf32>
    %117 = arith.truncf %116 : vector<4x64xf32> to vector<4x64xbf16>
    %c0_35 = arith.constant 0 : index
    %c0_36 = arith.constant 0 : index
    %118 = vector.load %arg4[%c0_35, %c0_36] : memref<64x256xbf16, #tpu.memory_space<vmem>>, vector<64x256xbf16>
    %cst_37 = arith.constant dense<0.000000e+00> : vector<4x256xf32>
    %119 = tpu.matmul %117, %118, %cst_37 {dimension_numbers = #tpu.dot_dimension_numbers<[1], [0], [0], [1], [0, 0, 1, 1], [], []>} : vector<4x64xbf16>, vector<64x256xbf16>, vector<4x256xf32> -> vector<4x256xf32>
    %120 = arith.addf %119, %96 : vector<4x256xf32>
    %121 = arith.addf %120, %8 : vector<4x256xf32>
    %122 = arith.negf %121 : vector<4x256xf32>
    %123 = math.exp %122 : vector<4x256xf32>
    %cst_38 = arith.constant 1.000000e+00 : f32
    %124 = vector.broadcast %cst_38 : f32 to vector<4x256xf32>
    %125 = arith.addf %124, %123 : vector<4x256xf32>
    %126 = arith.divf %124, %125 : vector<4x256xf32>
    %127 = vector.extract_strided_slice %126 {offsets = [0, 0], sizes = [4, 64], strides = [1, 1]} : vector<4x256xf32> to vector<4x64xf32>
    %128 = vector.extract_strided_slice %126 {offsets = [0, 64], sizes = [4, 64], strides = [1, 1]} : vector<4x256xf32> to vector<4x64xf32>
    %129 = vector.extract_strided_slice %126 {offsets = [0, 192], sizes = [4, 64], strides = [1, 1]} : vector<4x256xf32> to vector<4x64xf32>
    %130 = vector.extract_strided_slice %121 {offsets = [0, 128], sizes = [4, 64], strides = [1, 1]} : vector<4x256xf32> to vector<4x64xf32>
    %131 = math.tanh %130 : vector<4x64xf32>
    %132 = arith.mulf %128, %91 : vector<4x64xf32>
    %133 = arith.mulf %127, %131 : vector<4x64xf32>
    %134 = arith.addf %132, %133 : vector<4x64xf32>
    %135 = math.tanh %134 : vector<4x64xf32>
    %136 = arith.mulf %129, %135 : vector<4x64xf32>
    %137 = arith.truncf %136 : vector<4x64xf32> to vector<4x64xbf16>
    %c0_39 = arith.constant 0 : index
    %c0_40 = arith.constant 0 : index
    %138 = vector.load %arg5[%c0_39, %c0_40] : memref<64x256xbf16, #tpu.memory_space<vmem>>, vector<64x256xbf16>
    %cst_41 = arith.constant dense<0.000000e+00> : vector<4x256xf32>
    %139 = tpu.matmul %137, %138, %cst_41 {dimension_numbers = #tpu.dot_dimension_numbers<[1], [0], [0], [1], [0, 0, 1, 1], [], []>} : vector<4x64xbf16>, vector<64x256xbf16>, vector<4x256xf32> -> vector<4x256xf32>
    %140 = vector.extract_strided_slice %5 {offsets = [12, 0], sizes = [4, 256], strides = [1, 1]} : vector<32x256xf32> to vector<4x256xf32>
    %141 = arith.truncf %116 : vector<4x64xf32> to vector<4x64xbf16>
    %c0_42 = arith.constant 0 : index
    %c0_43 = arith.constant 0 : index
    %142 = vector.load %arg2[%c0_42, %c0_43] : memref<64x256xbf16, #tpu.memory_space<vmem>>, vector<64x256xbf16>
    %cst_44 = arith.constant dense<0.000000e+00> : vector<4x256xf32>
    %143 = tpu.matmul %141, %142, %cst_44 {dimension_numbers = #tpu.dot_dimension_numbers<[1], [0], [0], [1], [0, 0, 1, 1], [], []>} : vector<4x64xbf16>, vector<64x256xbf16>, vector<4x256xf32> -> vector<4x256xf32>
    %144 = arith.addf %140, %143 : vector<4x256xf32>
    %145 = arith.negf %144 : vector<4x256xf32>
    %146 = math.exp %145 : vector<4x256xf32>
    %cst_45 = arith.constant 1.000000e+00 : f32
    %147 = vector.broadcast %cst_45 : f32 to vector<4x256xf32>
    %148 = arith.addf %147, %146 : vector<4x256xf32>
    %149 = arith.divf %147, %148 : vector<4x256xf32>
    %150 = vector.extract_strided_slice %149 {offsets = [0, 0], sizes = [4, 64], strides = [1, 1]} : vector<4x256xf32> to vector<4x64xf32>
    %151 = vector.extract_strided_slice %149 {offsets = [0, 64], sizes = [4, 64], strides = [1, 1]} : vector<4x256xf32> to vector<4x64xf32>
    %152 = vector.extract_strided_slice %149 {offsets = [0, 192], sizes = [4, 64], strides = [1, 1]} : vector<4x256xf32> to vector<4x64xf32>
    %153 = vector.extract_strided_slice %144 {offsets = [0, 128], sizes = [4, 64], strides = [1, 1]} : vector<4x256xf32> to vector<4x64xf32>
    %154 = math.tanh %153 : vector<4x64xf32>
    %155 = arith.mulf %151, %114 : vector<4x64xf32>
    %156 = arith.mulf %150, %154 : vector<4x64xf32>
    %157 = arith.addf %155, %156 : vector<4x64xf32>
    %158 = math.tanh %157 : vector<4x64xf32>
    %159 = arith.mulf %152, %158 : vector<4x64xf32>
    %160 = arith.truncf %159 : vector<4x64xf32> to vector<4x64xbf16>
    %c0_46 = arith.constant 0 : index
    %c0_47 = arith.constant 0 : index
    %161 = vector.load %arg4[%c0_46, %c0_47] : memref<64x256xbf16, #tpu.memory_space<vmem>>, vector<64x256xbf16>
    %cst_48 = arith.constant dense<0.000000e+00> : vector<4x256xf32>
    %162 = tpu.matmul %160, %161, %cst_48 {dimension_numbers = #tpu.dot_dimension_numbers<[1], [0], [0], [1], [0, 0, 1, 1], [], []>} : vector<4x64xbf16>, vector<64x256xbf16>, vector<4x256xf32> -> vector<4x256xf32>
    %163 = arith.addf %162, %139 : vector<4x256xf32>
    %164 = arith.addf %163, %8 : vector<4x256xf32>
    %165 = arith.negf %164 : vector<4x256xf32>
    %166 = math.exp %165 : vector<4x256xf32>
    %cst_49 = arith.constant 1.000000e+00 : f32
    %167 = vector.broadcast %cst_49 : f32 to vector<4x256xf32>
    %168 = arith.addf %167, %166 : vector<4x256xf32>
    %169 = arith.divf %167, %168 : vector<4x256xf32>
    %170 = vector.extract_strided_slice %169 {offsets = [0, 0], sizes = [4, 64], strides = [1, 1]} : vector<4x256xf32> to vector<4x64xf32>
    %171 = vector.extract_strided_slice %169 {offsets = [0, 64], sizes = [4, 64], strides = [1, 1]} : vector<4x256xf32> to vector<4x64xf32>
    %172 = vector.extract_strided_slice %169 {offsets = [0, 192], sizes = [4, 64], strides = [1, 1]} : vector<4x256xf32> to vector<4x64xf32>
    %173 = vector.extract_strided_slice %164 {offsets = [0, 128], sizes = [4, 64], strides = [1, 1]} : vector<4x256xf32> to vector<4x64xf32>
    %174 = math.tanh %173 : vector<4x64xf32>
    %175 = arith.mulf %171, %134 : vector<4x64xf32>
    %176 = arith.mulf %170, %174 : vector<4x64xf32>
    %177 = arith.addf %175, %176 : vector<4x64xf32>
    %178 = math.tanh %177 : vector<4x64xf32>
    %179 = arith.mulf %172, %178 : vector<4x64xf32>
    %180 = arith.truncf %179 : vector<4x64xf32> to vector<4x64xbf16>
    %c0_50 = arith.constant 0 : index
    %c0_51 = arith.constant 0 : index
    %181 = vector.load %arg5[%c0_50, %c0_51] : memref<64x256xbf16, #tpu.memory_space<vmem>>, vector<64x256xbf16>
    %cst_52 = arith.constant dense<0.000000e+00> : vector<4x256xf32>
    %182 = tpu.matmul %180, %181, %cst_52 {dimension_numbers = #tpu.dot_dimension_numbers<[1], [0], [0], [1], [0, 0, 1, 1], [], []>} : vector<4x64xbf16>, vector<64x256xbf16>, vector<4x256xf32> -> vector<4x256xf32>
    %183 = vector.extract_strided_slice %5 {offsets = [16, 0], sizes = [4, 256], strides = [1, 1]} : vector<32x256xf32> to vector<4x256xf32>
    %184 = arith.truncf %159 : vector<4x64xf32> to vector<4x64xbf16>
    %c0_53 = arith.constant 0 : index
    %c0_54 = arith.constant 0 : index
    %185 = vector.load %arg2[%c0_53, %c0_54] : memref<64x256xbf16, #tpu.memory_space<vmem>>, vector<64x256xbf16>
    %cst_55 = arith.constant dense<0.000000e+00> : vector<4x256xf32>
    %186 = tpu.matmul %184, %185, %cst_55 {dimension_numbers = #tpu.dot_dimension_numbers<[1], [0], [0], [1], [0, 0, 1, 1], [], []>} : vector<4x64xbf16>, vector<64x256xbf16>, vector<4x256xf32> -> vector<4x256xf32>
    %187 = arith.addf %183, %186 : vector<4x256xf32>
    %188 = arith.negf %187 : vector<4x256xf32>
    %189 = math.exp %188 : vector<4x256xf32>
    %cst_56 = arith.constant 1.000000e+00 : f32
    %190 = vector.broadcast %cst_56 : f32 to vector<4x256xf32>
    %191 = arith.addf %190, %189 : vector<4x256xf32>
    %192 = arith.divf %190, %191 : vector<4x256xf32>
    %193 = vector.extract_strided_slice %192 {offsets = [0, 0], sizes = [4, 64], strides = [1, 1]} : vector<4x256xf32> to vector<4x64xf32>
    %194 = vector.extract_strided_slice %192 {offsets = [0, 64], sizes = [4, 64], strides = [1, 1]} : vector<4x256xf32> to vector<4x64xf32>
    %195 = vector.extract_strided_slice %192 {offsets = [0, 192], sizes = [4, 64], strides = [1, 1]} : vector<4x256xf32> to vector<4x64xf32>
    %196 = vector.extract_strided_slice %187 {offsets = [0, 128], sizes = [4, 64], strides = [1, 1]} : vector<4x256xf32> to vector<4x64xf32>
    %197 = math.tanh %196 : vector<4x64xf32>
    %198 = arith.mulf %194, %157 : vector<4x64xf32>
    %199 = arith.mulf %193, %197 : vector<4x64xf32>
    %200 = arith.addf %198, %199 : vector<4x64xf32>
    %201 = math.tanh %200 : vector<4x64xf32>
    %202 = arith.mulf %195, %201 : vector<4x64xf32>
    %203 = arith.truncf %202 : vector<4x64xf32> to vector<4x64xbf16>
    %c0_57 = arith.constant 0 : index
    %c0_58 = arith.constant 0 : index
    %204 = vector.load %arg4[%c0_57, %c0_58] : memref<64x256xbf16, #tpu.memory_space<vmem>>, vector<64x256xbf16>
    %cst_59 = arith.constant dense<0.000000e+00> : vector<4x256xf32>
    %205 = tpu.matmul %203, %204, %cst_59 {dimension_numbers = #tpu.dot_dimension_numbers<[1], [0], [0], [1], [0, 0, 1, 1], [], []>} : vector<4x64xbf16>, vector<64x256xbf16>, vector<4x256xf32> -> vector<4x256xf32>
    %206 = arith.addf %205, %182 : vector<4x256xf32>
    %207 = arith.addf %206, %8 : vector<4x256xf32>
    %208 = arith.negf %207 : vector<4x256xf32>
    %209 = math.exp %208 : vector<4x256xf32>
    %cst_60 = arith.constant 1.000000e+00 : f32
    %210 = vector.broadcast %cst_60 : f32 to vector<4x256xf32>
    %211 = arith.addf %210, %209 : vector<4x256xf32>
    %212 = arith.divf %210, %211 : vector<4x256xf32>
    %213 = vector.extract_strided_slice %212 {offsets = [0, 0], sizes = [4, 64], strides = [1, 1]} : vector<4x256xf32> to vector<4x64xf32>
    %214 = vector.extract_strided_slice %212 {offsets = [0, 64], sizes = [4, 64], strides = [1, 1]} : vector<4x256xf32> to vector<4x64xf32>
    %215 = vector.extract_strided_slice %212 {offsets = [0, 192], sizes = [4, 64], strides = [1, 1]} : vector<4x256xf32> to vector<4x64xf32>
    %216 = vector.extract_strided_slice %207 {offsets = [0, 128], sizes = [4, 64], strides = [1, 1]} : vector<4x256xf32> to vector<4x64xf32>
    %217 = math.tanh %216 : vector<4x64xf32>
    %218 = arith.mulf %214, %177 : vector<4x64xf32>
    %219 = arith.mulf %213, %217 : vector<4x64xf32>
    %220 = arith.addf %218, %219 : vector<4x64xf32>
    %221 = math.tanh %220 : vector<4x64xf32>
    %222 = arith.mulf %215, %221 : vector<4x64xf32>
    %223 = arith.truncf %222 : vector<4x64xf32> to vector<4x64xbf16>
    %c0_61 = arith.constant 0 : index
    %c0_62 = arith.constant 0 : index
    %224 = vector.load %arg5[%c0_61, %c0_62] : memref<64x256xbf16, #tpu.memory_space<vmem>>, vector<64x256xbf16>
    %cst_63 = arith.constant dense<0.000000e+00> : vector<4x256xf32>
    %225 = tpu.matmul %223, %224, %cst_63 {dimension_numbers = #tpu.dot_dimension_numbers<[1], [0], [0], [1], [0, 0, 1, 1], [], []>} : vector<4x64xbf16>, vector<64x256xbf16>, vector<4x256xf32> -> vector<4x256xf32>
    %226 = vector.extract_strided_slice %5 {offsets = [20, 0], sizes = [4, 256], strides = [1, 1]} : vector<32x256xf32> to vector<4x256xf32>
    %227 = arith.truncf %202 : vector<4x64xf32> to vector<4x64xbf16>
    %c0_64 = arith.constant 0 : index
    %c0_65 = arith.constant 0 : index
    %228 = vector.load %arg2[%c0_64, %c0_65] : memref<64x256xbf16, #tpu.memory_space<vmem>>, vector<64x256xbf16>
    %cst_66 = arith.constant dense<0.000000e+00> : vector<4x256xf32>
    %229 = tpu.matmul %227, %228, %cst_66 {dimension_numbers = #tpu.dot_dimension_numbers<[1], [0], [0], [1], [0, 0, 1, 1], [], []>} : vector<4x64xbf16>, vector<64x256xbf16>, vector<4x256xf32> -> vector<4x256xf32>
    %230 = arith.addf %226, %229 : vector<4x256xf32>
    %231 = arith.negf %230 : vector<4x256xf32>
    %232 = math.exp %231 : vector<4x256xf32>
    %cst_67 = arith.constant 1.000000e+00 : f32
    %233 = vector.broadcast %cst_67 : f32 to vector<4x256xf32>
    %234 = arith.addf %233, %232 : vector<4x256xf32>
    %235 = arith.divf %233, %234 : vector<4x256xf32>
    %236 = vector.extract_strided_slice %235 {offsets = [0, 0], sizes = [4, 64], strides = [1, 1]} : vector<4x256xf32> to vector<4x64xf32>
    %237 = vector.extract_strided_slice %235 {offsets = [0, 64], sizes = [4, 64], strides = [1, 1]} : vector<4x256xf32> to vector<4x64xf32>
    %238 = vector.extract_strided_slice %235 {offsets = [0, 192], sizes = [4, 64], strides = [1, 1]} : vector<4x256xf32> to vector<4x64xf32>
    %239 = vector.extract_strided_slice %230 {offsets = [0, 128], sizes = [4, 64], strides = [1, 1]} : vector<4x256xf32> to vector<4x64xf32>
    %240 = math.tanh %239 : vector<4x64xf32>
    %241 = arith.mulf %237, %200 : vector<4x64xf32>
    %242 = arith.mulf %236, %240 : vector<4x64xf32>
    %243 = arith.addf %241, %242 : vector<4x64xf32>
    %244 = math.tanh %243 : vector<4x64xf32>
    %245 = arith.mulf %238, %244 : vector<4x64xf32>
    %246 = arith.truncf %245 : vector<4x64xf32> to vector<4x64xbf16>
    %c0_68 = arith.constant 0 : index
    %c0_69 = arith.constant 0 : index
    %247 = vector.load %arg4[%c0_68, %c0_69] : memref<64x256xbf16, #tpu.memory_space<vmem>>, vector<64x256xbf16>
    %cst_70 = arith.constant dense<0.000000e+00> : vector<4x256xf32>
    %248 = tpu.matmul %246, %247, %cst_70 {dimension_numbers = #tpu.dot_dimension_numbers<[1], [0], [0], [1], [0, 0, 1, 1], [], []>} : vector<4x64xbf16>, vector<64x256xbf16>, vector<4x256xf32> -> vector<4x256xf32>
    %249 = arith.addf %248, %225 : vector<4x256xf32>
    %250 = arith.addf %249, %8 : vector<4x256xf32>
    %251 = arith.negf %250 : vector<4x256xf32>
    %252 = math.exp %251 : vector<4x256xf32>
    %cst_71 = arith.constant 1.000000e+00 : f32
    %253 = vector.broadcast %cst_71 : f32 to vector<4x256xf32>
    %254 = arith.addf %253, %252 : vector<4x256xf32>
    %255 = arith.divf %253, %254 : vector<4x256xf32>
    %256 = vector.extract_strided_slice %255 {offsets = [0, 0], sizes = [4, 64], strides = [1, 1]} : vector<4x256xf32> to vector<4x64xf32>
    %257 = vector.extract_strided_slice %255 {offsets = [0, 64], sizes = [4, 64], strides = [1, 1]} : vector<4x256xf32> to vector<4x64xf32>
    %258 = vector.extract_strided_slice %255 {offsets = [0, 192], sizes = [4, 64], strides = [1, 1]} : vector<4x256xf32> to vector<4x64xf32>
    %259 = vector.extract_strided_slice %250 {offsets = [0, 128], sizes = [4, 64], strides = [1, 1]} : vector<4x256xf32> to vector<4x64xf32>
    %260 = math.tanh %259 : vector<4x64xf32>
    %261 = arith.mulf %257, %220 : vector<4x64xf32>
    %262 = arith.mulf %256, %260 : vector<4x64xf32>
    %263 = arith.addf %261, %262 : vector<4x64xf32>
    %264 = math.tanh %263 : vector<4x64xf32>
    %265 = arith.mulf %258, %264 : vector<4x64xf32>
    %266 = arith.truncf %265 : vector<4x64xf32> to vector<4x64xbf16>
    %c0_72 = arith.constant 0 : index
    %c0_73 = arith.constant 0 : index
    %267 = vector.load %arg5[%c0_72, %c0_73] : memref<64x256xbf16, #tpu.memory_space<vmem>>, vector<64x256xbf16>
    %cst_74 = arith.constant dense<0.000000e+00> : vector<4x256xf32>
    %268 = tpu.matmul %266, %267, %cst_74 {dimension_numbers = #tpu.dot_dimension_numbers<[1], [0], [0], [1], [0, 0, 1, 1], [], []>} : vector<4x64xbf16>, vector<64x256xbf16>, vector<4x256xf32> -> vector<4x256xf32>
    %269 = vector.extract_strided_slice %5 {offsets = [24, 0], sizes = [4, 256], strides = [1, 1]} : vector<32x256xf32> to vector<4x256xf32>
    %270 = arith.truncf %245 : vector<4x64xf32> to vector<4x64xbf16>
    %c0_75 = arith.constant 0 : index
    %c0_76 = arith.constant 0 : index
    %271 = vector.load %arg2[%c0_75, %c0_76] : memref<64x256xbf16, #tpu.memory_space<vmem>>, vector<64x256xbf16>
    %cst_77 = arith.constant dense<0.000000e+00> : vector<4x256xf32>
    %272 = tpu.matmul %270, %271, %cst_77 {dimension_numbers = #tpu.dot_dimension_numbers<[1], [0], [0], [1], [0, 0, 1, 1], [], []>} : vector<4x64xbf16>, vector<64x256xbf16>, vector<4x256xf32> -> vector<4x256xf32>
    %273 = arith.addf %269, %272 : vector<4x256xf32>
    %274 = arith.negf %273 : vector<4x256xf32>
    %275 = math.exp %274 : vector<4x256xf32>
    %cst_78 = arith.constant 1.000000e+00 : f32
    %276 = vector.broadcast %cst_78 : f32 to vector<4x256xf32>
    %277 = arith.addf %276, %275 : vector<4x256xf32>
    %278 = arith.divf %276, %277 : vector<4x256xf32>
    %279 = vector.extract_strided_slice %278 {offsets = [0, 0], sizes = [4, 64], strides = [1, 1]} : vector<4x256xf32> to vector<4x64xf32>
    %280 = vector.extract_strided_slice %278 {offsets = [0, 64], sizes = [4, 64], strides = [1, 1]} : vector<4x256xf32> to vector<4x64xf32>
    %281 = vector.extract_strided_slice %278 {offsets = [0, 192], sizes = [4, 64], strides = [1, 1]} : vector<4x256xf32> to vector<4x64xf32>
    %282 = vector.extract_strided_slice %273 {offsets = [0, 128], sizes = [4, 64], strides = [1, 1]} : vector<4x256xf32> to vector<4x64xf32>
    %283 = math.tanh %282 : vector<4x64xf32>
    %284 = arith.mulf %280, %243 : vector<4x64xf32>
    %285 = arith.mulf %279, %283 : vector<4x64xf32>
    %286 = arith.addf %284, %285 : vector<4x64xf32>
    %287 = math.tanh %286 : vector<4x64xf32>
    %288 = arith.mulf %281, %287 : vector<4x64xf32>
    %289 = arith.truncf %288 : vector<4x64xf32> to vector<4x64xbf16>
    %c0_79 = arith.constant 0 : index
    %c0_80 = arith.constant 0 : index
    %290 = vector.load %arg4[%c0_79, %c0_80] : memref<64x256xbf16, #tpu.memory_space<vmem>>, vector<64x256xbf16>
    %cst_81 = arith.constant dense<0.000000e+00> : vector<4x256xf32>
    %291 = tpu.matmul %289, %290, %cst_81 {dimension_numbers = #tpu.dot_dimension_numbers<[1], [0], [0], [1], [0, 0, 1, 1], [], []>} : vector<4x64xbf16>, vector<64x256xbf16>, vector<4x256xf32> -> vector<4x256xf32>
    %292 = arith.addf %291, %268 : vector<4x256xf32>
    %293 = arith.addf %292, %8 : vector<4x256xf32>
    %294 = arith.negf %293 : vector<4x256xf32>
    %295 = math.exp %294 : vector<4x256xf32>
    %cst_82 = arith.constant 1.000000e+00 : f32
    %296 = vector.broadcast %cst_82 : f32 to vector<4x256xf32>
    %297 = arith.addf %296, %295 : vector<4x256xf32>
    %298 = arith.divf %296, %297 : vector<4x256xf32>
    %299 = vector.extract_strided_slice %298 {offsets = [0, 0], sizes = [4, 64], strides = [1, 1]} : vector<4x256xf32> to vector<4x64xf32>
    %300 = vector.extract_strided_slice %298 {offsets = [0, 64], sizes = [4, 64], strides = [1, 1]} : vector<4x256xf32> to vector<4x64xf32>
    %301 = vector.extract_strided_slice %298 {offsets = [0, 192], sizes = [4, 64], strides = [1, 1]} : vector<4x256xf32> to vector<4x64xf32>
    %302 = vector.extract_strided_slice %293 {offsets = [0, 128], sizes = [4, 64], strides = [1, 1]} : vector<4x256xf32> to vector<4x64xf32>
    %303 = math.tanh %302 : vector<4x64xf32>
    %304 = arith.mulf %300, %263 : vector<4x64xf32>
    %305 = arith.mulf %299, %303 : vector<4x64xf32>
    %306 = arith.addf %304, %305 : vector<4x64xf32>
    %307 = math.tanh %306 : vector<4x64xf32>
    %308 = arith.mulf %301, %307 : vector<4x64xf32>
    %309 = arith.truncf %308 : vector<4x64xf32> to vector<4x64xbf16>
    %c0_83 = arith.constant 0 : index
    %c0_84 = arith.constant 0 : index
    %310 = vector.load %arg5[%c0_83, %c0_84] : memref<64x256xbf16, #tpu.memory_space<vmem>>, vector<64x256xbf16>
    %cst_85 = arith.constant dense<0.000000e+00> : vector<4x256xf32>
    %311 = tpu.matmul %309, %310, %cst_85 {dimension_numbers = #tpu.dot_dimension_numbers<[1], [0], [0], [1], [0, 0, 1, 1], [], []>} : vector<4x64xbf16>, vector<64x256xbf16>, vector<4x256xf32> -> vector<4x256xf32>
    %312 = vector.extract_strided_slice %5 {offsets = [28, 0], sizes = [4, 256], strides = [1, 1]} : vector<32x256xf32> to vector<4x256xf32>
    %313 = arith.truncf %288 : vector<4x64xf32> to vector<4x64xbf16>
    %c0_86 = arith.constant 0 : index
    %c0_87 = arith.constant 0 : index
    %314 = vector.load %arg2[%c0_86, %c0_87] : memref<64x256xbf16, #tpu.memory_space<vmem>>, vector<64x256xbf16>
    %cst_88 = arith.constant dense<0.000000e+00> : vector<4x256xf32>
    %315 = tpu.matmul %313, %314, %cst_88 {dimension_numbers = #tpu.dot_dimension_numbers<[1], [0], [0], [1], [0, 0, 1, 1], [], []>} : vector<4x64xbf16>, vector<64x256xbf16>, vector<4x256xf32> -> vector<4x256xf32>
    %316 = arith.addf %312, %315 : vector<4x256xf32>
    %317 = arith.negf %316 : vector<4x256xf32>
    %318 = math.exp %317 : vector<4x256xf32>
    %cst_89 = arith.constant 1.000000e+00 : f32
    %319 = vector.broadcast %cst_89 : f32 to vector<4x256xf32>
    %320 = arith.addf %319, %318 : vector<4x256xf32>
    %321 = arith.divf %319, %320 : vector<4x256xf32>
    %322 = vector.extract_strided_slice %321 {offsets = [0, 0], sizes = [4, 64], strides = [1, 1]} : vector<4x256xf32> to vector<4x64xf32>
    %323 = vector.extract_strided_slice %321 {offsets = [0, 64], sizes = [4, 64], strides = [1, 1]} : vector<4x256xf32> to vector<4x64xf32>
    %324 = vector.extract_strided_slice %321 {offsets = [0, 192], sizes = [4, 64], strides = [1, 1]} : vector<4x256xf32> to vector<4x64xf32>
    %325 = vector.extract_strided_slice %316 {offsets = [0, 128], sizes = [4, 64], strides = [1, 1]} : vector<4x256xf32> to vector<4x64xf32>
    %326 = math.tanh %325 : vector<4x64xf32>
    %327 = arith.mulf %323, %286 : vector<4x64xf32>
    %328 = arith.mulf %322, %326 : vector<4x64xf32>
    %329 = arith.addf %327, %328 : vector<4x64xf32>
    %330 = math.tanh %329 : vector<4x64xf32>
    %331 = arith.mulf %324, %330 : vector<4x64xf32>
    %332 = arith.truncf %331 : vector<4x64xf32> to vector<4x64xbf16>
    %c0_90 = arith.constant 0 : index
    %c0_91 = arith.constant 0 : index
    %333 = vector.load %arg4[%c0_90, %c0_91] : memref<64x256xbf16, #tpu.memory_space<vmem>>, vector<64x256xbf16>
    %cst_92 = arith.constant dense<0.000000e+00> : vector<4x256xf32>
    %334 = tpu.matmul %332, %333, %cst_92 {dimension_numbers = #tpu.dot_dimension_numbers<[1], [0], [0], [1], [0, 0, 1, 1], [], []>} : vector<4x64xbf16>, vector<64x256xbf16>, vector<4x256xf32> -> vector<4x256xf32>
    %335 = arith.addf %334, %311 : vector<4x256xf32>
    %336 = arith.addf %335, %8 : vector<4x256xf32>
    %337 = arith.negf %336 : vector<4x256xf32>
    %338 = math.exp %337 : vector<4x256xf32>
    %cst_93 = arith.constant 1.000000e+00 : f32
    %339 = vector.broadcast %cst_93 : f32 to vector<4x256xf32>
    %340 = arith.addf %339, %338 : vector<4x256xf32>
    %341 = arith.divf %339, %340 : vector<4x256xf32>
    %342 = vector.extract_strided_slice %341 {offsets = [0, 0], sizes = [4, 64], strides = [1, 1]} : vector<4x256xf32> to vector<4x64xf32>
    %343 = vector.extract_strided_slice %341 {offsets = [0, 64], sizes = [4, 64], strides = [1, 1]} : vector<4x256xf32> to vector<4x64xf32>
    %344 = vector.extract_strided_slice %341 {offsets = [0, 192], sizes = [4, 64], strides = [1, 1]} : vector<4x256xf32> to vector<4x64xf32>
    %345 = vector.extract_strided_slice %336 {offsets = [0, 128], sizes = [4, 64], strides = [1, 1]} : vector<4x256xf32> to vector<4x64xf32>
    %346 = math.tanh %345 : vector<4x64xf32>
    %347 = arith.mulf %343, %306 : vector<4x64xf32>
    %348 = arith.mulf %342, %346 : vector<4x64xf32>
    %349 = arith.addf %347, %348 : vector<4x64xf32>
    %350 = math.tanh %349 : vector<4x64xf32>
    %351 = arith.mulf %344, %350 : vector<4x64xf32>
    %352 = arith.truncf %351 : vector<4x64xf32> to vector<4x64xbf16>
    %c0_94 = arith.constant 0 : index
    %c0_95 = arith.constant 0 : index
    %353 = vector.load %arg7[%c0_94, %c0_95] : memref<64x128xbf16, #tpu.memory_space<vmem>>, vector<64x128xbf16>
    %cst_96 = arith.constant dense<0.000000e+00> : vector<4x128xf32>
    %354 = tpu.matmul %352, %353, %cst_96 {dimension_numbers = #tpu.dot_dimension_numbers<[1], [0], [0], [1], [0, 0, 1, 1], [], []>} : vector<4x64xbf16>, vector<64x128xbf16>, vector<4x128xf32> -> vector<4x128xf32>
    %c0_97 = arith.constant 0 : index
    %c0_98 = arith.constant 0 : index
    %355 = vector.load %arg8[%c0_97, %c0_98] : memref<1x128xf32, #tpu.memory_space<vmem>>, vector<1x128xf32>
    %356 = vector.broadcast %355 : vector<1x128xf32> to vector<4x128xf32>
    %357 = arith.addf %354, %356 : vector<4x128xf32>
    %cst_99 = arith.constant 0.000000e+00 : f32
    %358 = vector.broadcast %cst_99 : f32 to vector<4x128xf32>
    %359 = arith.maximumf %357, %358 : vector<4x128xf32>
    %c0_100 = arith.constant 0 : index
    %c0_101 = arith.constant 0 : index
    %360 = vector.load %arg9[%c0_100, %c0_101] : memref<4x128xf32, #tpu.memory_space<vmem>>, vector<4x128xf32>
    tpu.vector_store %arg9[%c0_100, %c0_101], %359 {strides = array<i32>} : memref<4x128xf32, #tpu.memory_space<vmem>>, vector<4x128xf32>,
    return
  }
}

</mosaic_0001>

<llo_original>
// kernel: rnn_for_stacked_features.1
$region0: #{rnn_for_stacked_features.1}
  #allocation0 [shape = 'u32[]', space=smem, size = 0x4, offset = 0x4, fixed_abs, tag = 'smem constant byte address 0x4 - core index']
  #allocation1 [shape = 'u32[144,128]{1,0:T(1,128)}', space=vmem, size = 0x12000, scoped, tag = 'internal scratch']
  %s0 = inlined_call_operand.vmem [shape: bf16[32,16], index: 0, kind: input, shape index: {}]
  %s1 = inlined_call_operand.hbm [shape: bf16[16,256], index: 1, kind: input, shape index: {}]
  %s2 = inlined_call_operand.vmem [shape: bf16[64,256], index: 2, kind: input, shape index: {}]
  %s3 = inlined_call_operand.vmem [shape: f32[1,256], index: 3, kind: input, shape index: {}]
  %s4 = inlined_call_operand.hbm [shape: bf16[64,256], index: 4, kind: input, shape index: {}]
  %s5 = inlined_call_operand.hbm [shape: bf16[64,256], index: 5, kind: input, shape index: {}]
  %s6 = inlined_call_operand.hbm [shape: f32[1,256], index: 6, kind: input, shape index: {}]
  %s7 = inlined_call_operand.vmem [shape: bf16[64,128], index: 7, kind: input, shape index: {}]
  %s8 = inlined_call_operand.hbm [shape: f32[1,128], index: 8, kind: input, shape index: {}]
  %s9 = inlined_call_operand.hbm [shape: f32[4,128], index: 9, kind: output, shape index: {}]
  %s10 = sld [smem:[#allocation0]]
  $region66: #{rnn_for_stacked_features.1} parent=0
    _
  %s12 = ssub.s32 1, %s10
  %s13 = scalar_select 0, %s12, %s10
  $region1: #{rnn_for_stacked_features.1} parent=0
    #allocation2 [shape = 'u8[8192]{0}', space=vmem, size = 0x2000, scoped, tag = 'input window, operand 1, single buffered']
    #allocation3 [shape = 's32[1]{0}', space=sflag, size = 0x4, scoped, tag = 'scoped memory for rnn_for_stacked_features.1']
    #allocation4 [shape = 's32[1]{0}', space=sflag, size = 0x4, scoped, tag = 'scoped memory for rnn_for_stacked_features.1']
    #allocation5 [shape = 'u8[32768]{0}', space=vmem, size = 0x8000, scoped, tag = 'input window, operand 4, single buffered']
    #allocation6 [shape = 's32[1]{0}', space=sflag, size = 0x4, scoped, tag = 'scoped memory for rnn_for_stacked_features.1']
    #allocation7 [shape = 'u8[32768]{0}', space=vmem, size = 0x8000, scoped, tag = 'input window, operand 5, single buffered']
    #allocation8 [shape = 'u8[1024]{0}', space=vmem, size = 0x400, scoped, tag = 'input window, operand 6, single buffered']
    #allocation9 [shape = 's32[1]{0}', space=sflag, size = 0x4, scoped, tag = 'scoped memory for rnn_for_stacked_features.1']
    #allocation10 [shape = 'u8[512]{0}', space=vmem, size = 0x400, scoped, tag = 'input window, operand 8, single buffered']
    #allocation11 [shape = 'u8[2048]{0}', space=vmem, size = 0x800, scoped, tag = 'output window, operand 0, single buffered']
    %14 = vsyncpa [#allocation3], 0
    %15 = vsyncpa [#allocation6], 0
    %16 = vsyncpa [#allocation9], 0
    %17 = vsyncpa [#allocation4], 0
    // Predicated region
    $region2: #{rnn_for_stacked_features.1} parent=1 // pred_check
      _
    $region3: #{rnn_for_stacked_features.1} parent=1 // pred_check_branch
      %19 = sbr.rel (0) target = $region5
    $region4: #{rnn_for_stacked_features.1} parent=1 // pred_region
      _
    $region5: #{rnn_for_stacked_features.1} parent=1 // pred_fallthru
      _
    // Predicated region
    $region6: #{rnn_for_stacked_features.1} parent=1 // pred_check
      _
    $region7: #{rnn_for_stacked_features.1} parent=1 // pred_check_branch
      %21 = sbr.rel (0) target = $region9
    $region8: #{rnn_for_stacked_features.1} parent=1 // pred_region
      %s23 = ssub.s32 256, 256
      %24 = vsyncadd [#allocation3], %s23
      %s25 = sshll.u32 [#allocation2], 4
      %s26 = int_to_ptr.vmem [resolvable:$true] %s25
      %31 = dma.hbm_to_vmem [thread:$0]  %s1, 256, %s26, [#allocation3], 128, 128, 8
    $region9: #{rnn_for_stacked_features.1} parent=1 // pred_fallthru
      _
    // Predicated region
    $region10: #{rnn_for_stacked_features.1} parent=1 // pred_check
      _
    $region11: #{rnn_for_stacked_features.1} parent=1 // pred_check_branch
      %33 = sbr.rel (0) target = $region13
    $region12: #{rnn_for_stacked_features.1} parent=1 // pred_region
      _
    $region13: #{rnn_for_stacked_features.1} parent=1 // pred_fallthru
      _
    // Predicated region
    $region14: #{rnn_for_stacked_features.1} parent=1 // pred_check
      _
    $region15: #{rnn_for_stacked_features.1} parent=1 // pred_check_branch
      %35 = sbr.rel (0) target = $region17
    $region16: #{rnn_for_stacked_features.1} parent=1 // pred_region
      _
    $region17: #{rnn_for_stacked_features.1} parent=1 // pred_fallthru
      _
    // Predicated region
    $region18: #{rnn_for_stacked_features.1} parent=1 // pred_check
      _
    $region19: #{rnn_for_stacked_features.1} parent=1 // pred_check_branch
      %37 = sbr.rel (0) target = $region21
    $region20: #{rnn_for_stacked_features.1} parent=1 // pred_region
      %s39 = ssub.s32 1024, 1024
      %40 = vsyncadd [#allocation6], %s39
      %s41 = sshll.u32 [#allocation5], 4
      %s42 = int_to_ptr.vmem [resolvable:$true] %s41
      %47 = dma.hbm_to_vmem [thread:$0]  %s4, 1024, %s42, [#allocation6], 128, 128, 8
    $region21: #{rnn_for_stacked_features.1} parent=1 // pred_fallthru
      _
    // Predicated region
    $region22: #{rnn_for_stacked_features.1} parent=1 // pred_check
      _
    $region23: #{rnn_for_stacked_features.1} parent=1 // pred_check_branch
      %49 = sbr.rel (0) target = $region25
    $region24: #{rnn_for_stacked_features.1} parent=1 // pred_region
      %s51 = ssub.s32 1024, 1024
      %52 = vsyncadd [#allocation6], %s51
      %s53 = sshll.u32 [#allocation7], 4
      %s54 = int_to_ptr.vmem [resolvable:$true] %s53
      %59 = dma.hbm_to_vmem [thread:$0]  %s5, 1024, %s54, [#allocation6], 128, 128, 8
    $region25: #{rnn_for_stacked_features.1} parent=1 // pred_fallthru
      _
    // Predicated region
    $region26: #{rnn_for_stacked_features.1} parent=1 // pred_check
      _
    $region27: #{rnn_for_stacked_features.1} parent=1 // pred_check_branch
      %61 = sbr.rel (0) target = $region29
    $region28: #{rnn_for_stacked_features.1} parent=1 // pred_region
      %s63 = ssub.s32 32, 32
      %64 = vsyncadd [#allocation9], %s63
      %s66 = sshll.u32 [#allocation8], 4
      %s67 = int_to_ptr.vmem [resolvable:$true] %s66
      %69 = dma.hbm_to_vmem [thread:$0]  %s6, 32, %s67, [#allocation9]
    $region29: #{rnn_for_stacked_features.1} parent=1 // pred_fallthru
      _
    // Predicated region
    $region30: #{rnn_for_stacked_features.1} parent=1 // pred_check
      _
    $region31: #{rnn_for_stacked_features.1} parent=1 // pred_check_branch
      %71 = sbr.rel (0) target = $region33
    $region32: #{rnn_for_stacked_features.1} parent=1 // pred_region
      _
    $region33: #{rnn_for_stacked_features.1} parent=1 // pred_fallthru
      _
    // Predicated region
    $region34: #{rnn_for_stacked_features.1} parent=1 // pred_check
      _
    $region35: #{rnn_for_stacked_features.1} parent=1 // pred_check_branch
      %73 = sbr.rel (0) target = $region37
    $region36: #{rnn_for_stacked_features.1} parent=1 // pred_region
      %s75 = ssub.s32 16, 16
      %76 = vsyncadd [#allocation9], %s75
      %s78 = sshll.u32 [#allocation10], 4
      %s79 = int_to_ptr.vmem [resolvable:$true] %s78
      %81 = dma.hbm_to_vmem [thread:$0]  %s8, 16, %s79, [#allocation9]
    $region37: #{rnn_for_stacked_features.1} parent=1 // pred_fallthru
      _
    // Predicated region
    $region38: #{rnn_for_stacked_features.1} parent=1 // pred_check
      _
    $region39: #{rnn_for_stacked_features.1} parent=1 // pred_check_branch
      %83 = sbr.rel (0) target = $region41
    $region40: #{rnn_for_stacked_features.1} parent=1 // pred_region
      %84 = dma.done [#allocation3], 256
    $region41: #{rnn_for_stacked_features.1} parent=1 // pred_fallthru
      _
    // Predicated region
    $region42: #{rnn_for_stacked_features.1} parent=1 // pred_check
      _
    $region43: #{rnn_for_stacked_features.1} parent=1 // pred_check_branch
      %86 = sbr.rel (0) target = $region45
    $region44: #{rnn_for_stacked_features.1} parent=1 // pred_region
      %87 = dma.done [#allocation6], 1024
    $region45: #{rnn_for_stacked_features.1} parent=1 // pred_fallthru
      _
    // Predicated region
    $region46: #{rnn_for_stacked_features.1} parent=1 // pred_check
      _
    $region47: #{rnn_for_stacked_features.1} parent=1 // pred_check_branch
      %89 = sbr.rel (0) target = $region49
    $region48: #{rnn_for_stacked_features.1} parent=1 // pred_region
      %90 = dma.done [#allocation6], 1024
    $region49: #{rnn_for_stacked_features.1} parent=1 // pred_fallthru
      _
    // Predicated region
    $region50: #{rnn_for_stacked_features.1} parent=1 // pred_check
      _
    $region51: #{rnn_for_stacked_features.1} parent=1 // pred_check_branch
      %92 = sbr.rel (0) target = $region53
    $region52: #{rnn_for_stacked_features.1} parent=1 // pred_region
      %93 = dma.done [#allocation9], 32
    $region53: #{rnn_for_stacked_features.1} parent=1 // pred_fallthru
      _
    // Predicated region
    $region54: #{rnn_for_stacked_features.1} parent=1 // pred_check
      _
    $region55: #{rnn_for_stacked_features.1} parent=1 // pred_check_branch
      %95 = sbr.rel (0) target = $region57
    $region56: #{rnn_for_stacked_features.1} parent=1 // pred_region
      %96 = dma.done [#allocation9], 16
    $region57: #{rnn_for_stacked_features.1} parent=1 // pred_fallthru
      _
    %v98 = vld [vmem:[%s0] sm:$0xf]
    %v99 = vld [vmem:[%s0 + $0x4] sm:$0xf]
    %v100 = vld [vmem:[%s0 + $0x8] sm:$0xf]
    %v101 = vld [vmem:[%s0 + $0xc] sm:$0xf]
    %v102 = vld [vmem:[#allocation2] sm:$0xff]
    %v103 = vld [vmem:[#allocation2 + $0x8] sm:$0xff]
    %v104 = vld [vmem:[%s3] sm:$0x3]
    %v106 = vlaneseq
    %v107 = vshrl.u32 %v106, 7
    %v108 = vsub.s32 0, %v107
    %v109 = vrot.slane %v104, %v108
    %v110 = vlaneseq
    %v111 = vshrl.u32 %v110, 7
    %v112 = vsub.s32 1, %v111
    %v113 = vrot.slane %v104, %v112
    %v120 = vunpack.c.l.b16 %v98
    %v121 = vunpack.c.l.b16 %v99
    %v122 = vunpack.c.l.b16 %v100
    %v123 = vunpack.c.l.b16 %v101
    %v124 = vpack.c.b16 %v121, %v120
    %v125 = vpack.c.b16 %v123, %v122
    %v128 = vunpack.c.l.b16 %v102
    %v129 = vunpack.c.h.b16 %v102
    %v130 = vunpack.c.l.b16 %v103
    %v131 = vunpack.c.h.b16 %v103
    %v132 = vpack.c.b16 %v130, %v128
    %v133 = vpack.c.b16 %v131, %v129
    %vm136 = vcmask 130048
    %v138 = vsel %vm136, %v124, 0
    %v141 = vsel %vm136, %v125, 0
    %143 = vmatprep.subr.bf16.mxu0 %v133
    %144 = vmatpush1.bf16.msra.mxu0 %v132
    %145 = vmatprep.subr.bf16.mxu0 0
    %146 = vmatpush1.bf16.msra.mxu0 0
    %147 = vmatprep.subr.bf16.mxu0 0
    %148 = vmatpush1.bf16.msra.mxu0 0
    %149 = vmatprep.subr.bf16.mxu0 0
    %150 = vmatpush1.bf16.msra.mxu0 0
    %151 = vmatprep.subr.bf16.mxu0 0
    %152 = vmatpush1.bf16.msra.mxu0 0
    %153 = vmatprep.subr.bf16.mxu0 0
    %154 = vmatpush1.bf16.msra.mxu0 0
    %155 = vmatprep.subr.bf16.mxu0 0
    %156 = vmatpush1.bf16.msra.mxu0 0
    %157 = vmatprep.subr.bf16.mxu0 0
    %158 = vmatpush1.bf16.msra.mxu0 0
    %159 = vmatprep.subr.bf16.mxu0 0
    %160 = vmatpush1.bf16.msra.mxu0 0
    %161 = vmatprep.subr.bf16.mxu0 0
    %162 = vmatpush1.bf16.msra.mxu0 0
    %163 = vmatprep.subr.bf16.mxu0 0
    %164 = vmatpush1.bf16.msra.mxu0 0
    %165 = vmatprep.subr.bf16.mxu0 0
    %166 = vmatpush1.bf16.msra.mxu0 0
    %167 = vmatprep.subr.bf16.mxu0 0
    %168 = vmatpush1.bf16.msra.mxu0 0
    %169 = vmatprep.subr.bf16.mxu0 0
    %170 = vmatpush1.bf16.msra.mxu0 0
    %171 = vmatprep.subr.bf16.mxu0 0
    %172 = vmatpush1.bf16.msra.mxu0 0
    %173 = vmatprep.subr.bf16.mxu0 0
    %174 = vmatpush1.bf16.msra.mxu0 0
    %175 = vmatprep.mubr.bf16.mxu0 0
    %176 = vmatmul.mubr.bf16.gmra.mrb[0].mxu0 %v138
    %v177 = vpop.f32.mrb[0].mxu0
    %v178 = vadd.f32 %v109, %v177
    %v179 = vpop.f32.mrb[0].mxu0
    %v180 = vadd.f32 %v113, %v179
    %v181 = vpop.f32.mrb[0].mxu0
    %v182 = vadd.f32 %v109, %v181
    %v183 = vpop.f32.mrb[0].mxu0
    %v184 = vadd.f32 %v113, %v183
    %185 = vmatprep.mubr.bf16.mxu0 0
    %186 = vmatmul.mubr.bf16.gmra.mrb[0].mxu0 %v141
    %v187 = vpop.f32.mrb[0].mxu0
    %v188 = vadd.f32 %v109, %v187
    %v189 = vpop.f32.mrb[0].mxu0
    %v190 = vadd.f32 %v113, %v189
    %v191 = vpop.f32.mrb[0].mxu0
    %v192 = vadd.f32 %v109, %v191
    %v193 = vpop.f32.mrb[0].mxu0
    %v194 = vadd.f32 %v113, %v193
    %195 = vdwg.mxu0
    %v196 = vld [vmem:[#allocation8] sm:$0x3]
    %v198 = vlaneseq
    %v199 = vshrl.u32 %v198, 7
    %v200 = vsub.s32 0, %v199
    %v201 = vrot.slane %v196, %v200
    %v202 = vlaneseq
    %v203 = vshrl.u32 %v202, 7
    %v204 = vsub.s32 1, %v203
    %v205 = vrot.slane %v196, %v204
    %v208 = vld [vmem:[%s2] sm:$0xff]
    %v209 = vld [vmem:[%s2 + $0x8] sm:$0xff]
    %v210 = vld [vmem:[%s2 + $0x10] sm:$0xff]
    %v211 = vld [vmem:[%s2 + $0x18] sm:$0xff]
    %v212 = vld [vmem:[%s2 + $0x20] sm:$0xff]
    %v213 = vld [vmem:[%s2 + $0x28] sm:$0xff]
    %v214 = vld [vmem:[%s2 + $0x30] sm:$0xff]
    %v215 = vld [vmem:[%s2 + $0x38] sm:$0xff]
    %v224 = vunpack.c.l.b16 %v208
    %v225 = vunpack.c.h.b16 %v208
    %v226 = vunpack.c.l.b16 %v209
    %v227 = vunpack.c.h.b16 %v209
    %v228 = vunpack.c.l.b16 %v210
    %v229 = vunpack.c.h.b16 %v210
    %v230 = vunpack.c.l.b16 %v211
    %v231 = vunpack.c.h.b16 %v211
    %v232 = vunpack.c.l.b16 %v212
    %v233 = vunpack.c.h.b16 %v212
    %v234 = vunpack.c.l.b16 %v213
    %v235 = vunpack.c.h.b16 %v213
    %v236 = vunpack.c.l.b16 %v214
    %v237 = vunpack.c.h.b16 %v214
    %v238 = vunpack.c.l.b16 %v215
    %v239 = vunpack.c.h.b16 %v215
    %v240 = vpack.c.b16 %v226, %v224
    %v241 = vpack.c.b16 %v227, %v225
    %v242 = vpack.c.b16 %v230, %v228
    %v243 = vpack.c.b16 %v231, %v229
    %v244 = vpack.c.b16 %v234, %v232
    %v245 = vpack.c.b16 %v235, %v233
    %v246 = vpack.c.b16 %v238, %v236
    %v247 = vpack.c.b16 %v239, %v237
    %vm256 = vcmask 523264
    %v258 = vsel %vm256, 0, 0
    %260 = vmatprep.subr.bf16.mxu0 %v241
    %261 = vmatpush1.bf16.msra.mxu0 %v240
    %262 = vmatprep.subr.bf16.mxu0 %v243
    %263 = vmatpush1.bf16.msra.mxu0 %v242
    %264 = vmatprep.subr.bf16.mxu0 %v245
    %265 = vmatpush1.bf16.msra.mxu0 %v244
    %266 = vmatprep.subr.bf16.mxu0 %v247
    %267 = vmatpush1.bf16.msra.mxu0 %v246
    %268 = vmatprep.subr.bf16.mxu0 0
    %269 = vmatpush1.bf16.msra.mxu0 0
    %270 = vmatprep.subr.bf16.mxu0 0
    %271 = vmatpush1.bf16.msra.mxu0 0
    %272 = vmatprep.subr.bf16.mxu0 0
    %273 = vmatpush1.bf16.msra.mxu0 0
    %274 = vmatprep.subr.bf16.mxu0 0
    %275 = vmatpush1.bf16.msra.mxu0 0
    %276 = vmatprep.subr.bf16.mxu0 0
    %277 = vmatpush1.bf16.msra.mxu0 0
    %278 = vmatprep.subr.bf16.mxu0 0
    %279 = vmatpush1.bf16.msra.mxu0 0
    %280 = vmatprep.subr.bf16.mxu0 0
    %281 = vmatpush1.bf16.msra.mxu0 0
    %282 = vmatprep.subr.bf16.mxu0 0
    %283 = vmatpush1.bf16.msra.mxu0 0
    %284 = vmatprep.subr.bf16.mxu0 0
    %285 = vmatpush1.bf16.msra.mxu0 0
    %286 = vmatprep.subr.bf16.mxu0 0
    %287 = vmatpush1.bf16.msra.mxu0 0
    %288 = vmatprep.subr.bf16.mxu0 0
    %289 = vmatpush1.bf16.msra.mxu0 0
    %290 = vmatprep.subr.bf16.mxu0 0
    %291 = vmatpush1.bf16.msra.mxu0 0
    %292 = vmatprep.mubr.bf16.mxu0 0
    %293 = vmatmul.mubr.bf16.gmra.mrb[0].mxu0 %v258
    %v294 = vpop.f32.mrb[0].mxu0
    %v295 = vadd.f32 0.0, %v294
    %v296 = vpop.f32.mrb[0].mxu0
    %v297 = vadd.f32 0.0, %v296
    %v298 = vpop.f32.mrb[0].mxu0
    %v299 = vpop.f32.mrb[0].mxu0
    %300 = vdwg.mxu0
    %v301 = vadd.f32 %v178, %v295
    %v302 = vadd.f32 %v180, %v297
    %v303 = vxor.u32 %v301, 2147483648
    %v304 = vxor.u32 %v302, 2147483648
    %v305 = vmul.f32 %v303, 1.442695
    %v306 = vpow.pop %v305
    %v307 = vmul.f32 %v304, 1.442695
    %v308 = vpow.pop %v307
    %v309 = vadd.f32 %v306, 1.0
    %v310 = vadd.f32 %v308, 1.0
    %v311 = vrcp.pop %v309
    %v312 = vmul.f32 1.0, %v311
    %v313 = vrcp.pop %v310
    %v314 = vmul.f32 1.0, %v313
    %v315 = vtanh.pop %v302
    %v316 = vmul.f32 %v312, 0.0
    %v317 = vmul.f32 %v312, %v315
    %319 = vrot.lane.b32.xlu0 %v317, 64
    %v320 = vpop.permute.xlu0 %319
    %v322 = vadd.f32 %v316, %v320
    %v323 = vtanh.pop %v322
    %v324 = vmul.f32 %v314, %v323
    %v325 = vpack.c.bf16 %v324, %v324
    %v326 = vld [vmem:[#allocation5] sm:$0xff]
    %v327 = vld [vmem:[#allocation5 + $0x8] sm:$0xff]
    %v328 = vld [vmem:[#allocation5 + $0x10] sm:$0xff]
    %v329 = vld [vmem:[#allocation5 + $0x18] sm:$0xff]
    %v330 = vld [vmem:[#allocation5 + $0x20] sm:$0xff]
    %v331 = vld [vmem:[#allocation5 + $0x28] sm:$0xff]
    %v332 = vld [vmem:[#allocation5 + $0x30] sm:$0xff]
    %v333 = vld [vmem:[#allocation5 + $0x38] sm:$0xff]
    %335 = vrot.lane.b32.xlu0 %v325, 64
    %v336 = vpop.permute.xlu0 %335
    %v345 = vunpack.c.l.b16 %v326
    %v346 = vunpack.c.h.b16 %v326
    %v347 = vunpack.c.l.b16 %v327
    %v348 = vunpack.c.h.b16 %v327
    %v349 = vunpack.c.l.b16 %v328
    %v350 = vunpack.c.h.b16 %v328
    %v351 = vunpack.c.l.b16 %v329
    %v352 = vunpack.c.h.b16 %v329
    %v353 = vunpack.c.l.b16 %v330
    %v354 = vunpack.c.h.b16 %v330
    %v355 = vunpack.c.l.b16 %v331
    %v356 = vunpack.c.h.b16 %v331
    %v357 = vunpack.c.l.b16 %v332
    %v358 = vunpack.c.h.b16 %v332
    %v359 = vunpack.c.l.b16 %v333
    %v360 = vunpack.c.h.b16 %v333
    %v361 = vpack.c.b16 %v347, %v345
    %v362 = vpack.c.b16 %v348, %v346
    %v363 = vpack.c.b16 %v351, %v349
    %v364 = vpack.c.b16 %v352, %v350
    %v365 = vpack.c.b16 %v355, %v353
    %v366 = vpack.c.b16 %v356, %v354
    %v367 = vpack.c.b16 %v359, %v357
    %v368 = vpack.c.b16 %v360, %v358
    %v378 = vsel %vm256, %v336, 0
    %380 = vmatprep.subr.bf16.mxu0 %v362
    %381 = vmatpush1.bf16.msra.mxu0 %v361
    %382 = vmatprep.subr.bf16.mxu0 %v364
    %383 = vmatpush1.bf16.msra.mxu0 %v363
    %384 = vmatprep.subr.bf16.mxu0 %v366
    %385 = vmatpush1.bf16.msra.mxu0 %v365
    %386 = vmatprep.subr.bf16.mxu0 %v368
    %387 = vmatpush1.bf16.msra.mxu0 %v367
    %388 = vmatprep.subr.bf16.mxu0 0
    %389 = vmatpush1.bf16.msra.mxu0 0
    %390 = vmatprep.subr.bf16.mxu0 0
    %391 = vmatpush1.bf16.msra.mxu0 0
    %392 = vmatprep.subr.bf16.mxu0 0
    %393 = vmatpush1.bf16.msra.mxu0 0
    %394 = vmatprep.subr.bf16.mxu0 0
    %395 = vmatpush1.bf16.msra.mxu0 0
    %396 = vmatprep.subr.bf16.mxu0 0
    %397 = vmatpush1.bf16.msra.mxu0 0
    %398 = vmatprep.subr.bf16.mxu0 0
    %399 = vmatpush1.bf16.msra.mxu0 0
    %400 = vmatprep.subr.bf16.mxu0 0
    %401 = vmatpush1.bf16.msra.mxu0 0
    %402 = vmatprep.subr.bf16.mxu0 0
    %403 = vmatpush1.bf16.msra.mxu0 0
    %404 = vmatprep.subr.bf16.mxu0 0
    %405 = vmatpush1.bf16.msra.mxu0 0
    %406 = vmatprep.subr.bf16.mxu0 0
    %407 = vmatpush1.bf16.msra.mxu0 0
    %408 = vmatprep.subr.bf16.mxu0 0
    %409 = vmatpush1.bf16.msra.mxu0 0
    %410 = vmatprep.subr.bf16.mxu0 0
    %411 = vmatpush1.bf16.msra.mxu0 0
    %412 = vmatprep.mubr.bf16.mxu0 0
    %413 = vmatmul.mubr.bf16.gmra.mrb[0].mxu0 %v378
    %v414 = vpop.f32.mrb[0].mxu0
    %v415 = vadd.f32 %v201, %v414
    %v416 = vpop.f32.mrb[0].mxu0
    %v417 = vadd.f32 %v205, %v416
    %v418 = vpop.f32.mrb[0].mxu0
    %v419 = vpop.f32.mrb[0].mxu0
    %420 = vdwg.mxu0
    %v421 = vxor.u32 %v415, 2147483648
    %v422 = vxor.u32 %v417, 2147483648
    %v423 = vmul.f32 %v421, 1.442695
    %v424 = vpow.pop %v423
    %v425 = vmul.f32 %v422, 1.442695
    %v426 = vpow.pop %v425
    %v427 = vadd.f32 %v424, 1.0
    %v428 = vadd.f32 %v426, 1.0
    %v429 = vrcp.pop %v427
    %v430 = vmul.f32 1.0, %v429
    %v431 = vrcp.pop %v428
    %v432 = vmul.f32 1.0, %v431
    %v433 = vtanh.pop %v417
    %v434 = vmul.f32 %v430, 0.0
    %v435 = vmul.f32 %v430, %v433
    %437 = vrot.lane.b32.xlu0 %v435, 64
    %v438 = vpop.permute.xlu0 %437
    %v440 = vadd.f32 %v434, %v438
    %v441 = vtanh.pop %v440
    %v442 = vmul.f32 %v432, %v441
    %v443 = vpack.c.bf16 %v442, %v442
    %v444 = vld [vmem:[#allocation7] sm:$0xff]
    %v445 = vld [vmem:[#allocation7 + $0x8] sm:$0xff]
    %v446 = vld [vmem:[#allocation7 + $0x10] sm:$0xff]
    %v447 = vld [vmem:[#allocation7 + $0x18] sm:$0xff]
    %v448 = vld [vmem:[#allocation7 + $0x20] sm:$0xff]
    %v449 = vld [vmem:[#allocation7 + $0x28] sm:$0xff]
    %v450 = vld [vmem:[#allocation7 + $0x30] sm:$0xff]
    %v451 = vld [vmem:[#allocation7 + $0x38] sm:$0xff]
    %453 = vrot.lane.b32.xlu0 %v443, 64
    %v454 = vpop.permute.xlu0 %453
    %v463 = vunpack.c.l.b16 %v444
    %v464 = vunpack.c.h.b16 %v444
    %v465 = vunpack.c.l.b16 %v445
    %v466 = vunpack.c.h.b16 %v445
    %v467 = vunpack.c.l.b16 %v446
    %v468 = vunpack.c.h.b16 %v446
    %v469 = vunpack.c.l.b16 %v447
    %v470 = vunpack.c.h.b16 %v447
    %v471 = vunpack.c.l.b16 %v448
    %v472 = vunpack.c.h.b16 %v448
    %v473 = vunpack.c.l.b16 %v449
    %v474 = vunpack.c.h.b16 %v449
    %v475 = vunpack.c.l.b16 %v450
    %v476 = vunpack.c.h.b16 %v450
    %v477 = vunpack.c.l.b16 %v451
    %v478 = vunpack.c.h.b16 %v451
    %v479 = vpack.c.b16 %v465, %v463
    %v480 = vpack.c.b16 %v466, %v464
    %v481 = vpack.c.b16 %v469, %v467
    %v482 = vpack.c.b16 %v470, %v468
    %v483 = vpack.c.b16 %v473, %v471
    %v484 = vpack.c.b16 %v474, %v472
    %v485 = vpack.c.b16 %v477, %v475
    %v486 = vpack.c.b16 %v478, %v476
    %v496 = vsel %vm256, %v454, 0
    %498 = vmatprep.subr.bf16.mxu0 %v480
    %499 = vmatpush1.bf16.msra.mxu0 %v479
    %500 = vmatprep.subr.bf16.mxu0 %v482
    %501 = vmatpush1.bf16.msra.mxu0 %v481
    %502 = vmatprep.subr.bf16.mxu0 %v484
    %503 = vmatpush1.bf16.msra.mxu0 %v483
    %504 = vmatprep.subr.bf16.mxu0 %v486
    %505 = vmatpush1.bf16.msra.mxu0 %v485
    %506 = vmatprep.subr.bf16.mxu0 0
    %507 = vmatpush1.bf16.msra.mxu0 0
    %508 = vmatprep.subr.bf16.mxu0 0
    %509 = vmatpush1.bf16.msra.mxu0 0
    %510 = vmatprep.subr.bf16.mxu0 0
    %511 = vmatpush1.bf16.msra.mxu0 0
    %512 = vmatprep.subr.bf16.mxu0 0
    %513 = vmatpush1.bf16.msra.mxu0 0
    %514 = vmatprep.subr.bf16.mxu0 0
    %515 = vmatpush1.bf16.msra.mxu0 0
    %516 = vmatprep.subr.bf16.mxu0 0
    %517 = vmatpush1.bf16.msra.mxu0 0
    %518 = vmatprep.subr.bf16.mxu0 0
    %519 = vmatpush1.bf16.msra.mxu0 0
    %520 = vmatprep.subr.bf16.mxu0 0
    %521 = vmatpush1.bf16.msra.mxu0 0
    %522 = vmatprep.subr.bf16.mxu0 0
    %523 = vmatpush1.bf16.msra.mxu0 0
    %524 = vmatprep.subr.bf16.mxu0 0
    %525 = vmatpush1.bf16.msra.mxu0 0
    %526 = vmatprep.subr.bf16.mxu0 0
    %527 = vmatpush1.bf16.msra.mxu0 0
    %528 = vmatprep.subr.bf16.mxu0 0
    %529 = vmatpush1.bf16.msra.mxu0 0
    %530 = vmatprep.mubr.bf16.mxu0 0
    %531 = vmatmul.mubr.bf16.gmra.mrb[0].mxu0 %v496
    %v532 = vpop.f32.mrb[0].mxu0
    %v533 = vadd.f32 0.0, %v532
    %v534 = vpop.f32.mrb[0].mxu0
    %v535 = vadd.f32 0.0, %v534
    %v536 = vpop.f32.mrb[0].mxu0
    %v537 = vpop.f32.mrb[0].mxu0
    %538 = vdwg.mxu0
    %539 = vmatprep.subr.bf16.mxu0 %v241
    %540 = vmatpush1.bf16.msra.mxu0 %v240
    %541 = vmatprep.subr.bf16.mxu0 %v243
    %542 = vmatpush1.bf16.msra.mxu0 %v242
    %543 = vmatprep.subr.bf16.mxu0 %v245
    %544 = vmatpush1.bf16.msra.mxu0 %v244
    %545 = vmatprep.subr.bf16.mxu0 %v247
    %546 = vmatpush1.bf16.msra.mxu0 %v246
    %547 = vmatprep.subr.bf16.mxu0 0
    %548 = vmatpush1.bf16.msra.mxu0 0
    %549 = vmatprep.subr.bf16.mxu0 0
    %550 = vmatpush1.bf16.msra.mxu0 0
    %551 = vmatprep.subr.bf16.mxu0 0
    %552 = vmatpush1.bf16.msra.mxu0 0
    %553 = vmatprep.subr.bf16.mxu0 0
    %554 = vmatpush1.bf16.msra.mxu0 0
    %555 = vmatprep.subr.bf16.mxu0 0
    %556 = vmatpush1.bf16.msra.mxu0 0
    %557 = vmatprep.subr.bf16.mxu0 0
    %558 = vmatpush1.bf16.msra.mxu0 0
    %559 = vmatprep.subr.bf16.mxu0 0
    %560 = vmatpush1.bf16.msra.mxu0 0
    %561 = vmatprep.subr.bf16.mxu0 0
    %562 = vmatpush1.bf16.msra.mxu0 0
    %563 = vmatprep.subr.bf16.mxu0 0
    %564 = vmatpush1.bf16.msra.mxu0 0
    %565 = vmatprep.subr.bf16.mxu0 0
    %566 = vmatpush1.bf16.msra.mxu0 0
    %567 = vmatprep.subr.bf16.mxu0 0
    %568 = vmatpush1.bf16.msra.mxu0 0
    %569 = vmatprep.subr.bf16.mxu0 0
    %570 = vmatpush1.bf16.msra.mxu0 0
    %571 = vmatprep.mubr.bf16.mxu0 0
    %572 = vmatmul.mubr.bf16.gmra.mrb[0].mxu0 %v378
    %v573 = vpop.f32.mrb[0].mxu0
    %v574 = vadd.f32 0.0, %v573
    %v575 = vpop.f32.mrb[0].mxu0
    %v576 = vadd.f32 0.0, %v575
    %v577 = vpop.f32.mrb[0].mxu0
    %v578 = vpop.f32.mrb[0].mxu0
    %579 = vdwg.mxu0
    %v582 = vrot.slane %v574, 4
    %v583 = vrot.slane %v576, 4
    %v586 = vadd.f32 %v178, %v582
    %v587 = vadd.f32 %v180, %v583
    %v588 = vxor.u32 %v586, 2147483648
    %v589 = vxor.u32 %v587, 2147483648
    %v590 = vmul.f32 %v588, 1.442695
    %v591 = vpow.pop %v590
    %v592 = vmul.f32 %v589, 1.442695
    %v593 = vpow.pop %v592
    %v594 = vadd.f32 %v591, 1.0
    %v595 = vadd.f32 %v593, 1.0
    %v596 = vrcp.pop %v594
    %v597 = vmul.f32 1.0, %v596
    %v598 = vrcp.pop %v595
    %v599 = vmul.f32 1.0, %v598
    %v600 = vtanh.pop %v587
    %v602 = vrot.slane %v322, 4
    %v604 = vmul.f32 %v597, %v602
    %v605 = vmul.f32 %v597, %v600
    %607 = vrot.lane.b32.xlu0 %v605, 64
    %v608 = vpop.permute.xlu0 %607
    %v610 = vadd.f32 %v604, %v608
    %v611 = vtanh.pop %v610
    %v612 = vmul.f32 %v599, %v611
    %v613 = vpack.c.bf16 %v612, %v612
    %v615 = vrot.slane %v613, 2
    %616 = vrot.lane.b32.xlu0 %v615, 64
    %v617 = vpop.permute.xlu0 %616
    %v619 = vsel %vm256, %v617, 0
    %621 = vmatprep.subr.bf16.mxu0 %v362
    %622 = vmatpush1.bf16.msra.mxu0 %v361
    %623 = vmatprep.subr.bf16.mxu0 %v364
    %624 = vmatpush1.bf16.msra.mxu0 %v363
    %625 = vmatprep.subr.bf16.mxu0 %v366
    %626 = vmatpush1.bf16.msra.mxu0 %v365
    %627 = vmatprep.subr.bf16.mxu0 %v368
    %628 = vmatpush1.bf16.msra.mxu0 %v367
    %629 = vmatprep.subr.bf16.mxu0 0
    %630 = vmatpush1.bf16.msra.mxu0 0
    %631 = vmatprep.subr.bf16.mxu0 0
    %632 = vmatpush1.bf16.msra.mxu0 0
    %633 = vmatprep.subr.bf16.mxu0 0
    %634 = vmatpush1.bf16.msra.mxu0 0
    %635 = vmatprep.subr.bf16.mxu0 0
    %636 = vmatpush1.bf16.msra.mxu0 0
    %637 = vmatprep.subr.bf16.mxu0 0
    %638 = vmatpush1.bf16.msra.mxu0 0
    %639 = vmatprep.subr.bf16.mxu0 0
    %640 = vmatpush1.bf16.msra.mxu0 0
    %641 = vmatprep.subr.bf16.mxu0 0
    %642 = vmatpush1.bf16.msra.mxu0 0
    %643 = vmatprep.subr.bf16.mxu0 0
    %644 = vmatpush1.bf16.msra.mxu0 0
    %645 = vmatprep.subr.bf16.mxu0 0
    %646 = vmatpush1.bf16.msra.mxu0 0
    %647 = vmatprep.subr.bf16.mxu0 0
    %648 = vmatpush1.bf16.msra.mxu0 0
    %649 = vmatprep.subr.bf16.mxu0 0
    %650 = vmatpush1.bf16.msra.mxu0 0
    %651 = vmatprep.subr.bf16.mxu0 0
    %652 = vmatpush1.bf16.msra.mxu0 0
    %653 = vmatprep.mubr.bf16.mxu0 0
    %654 = vmatmul.mubr.bf16.gmra.mrb[0].mxu0 %v619
    %v655 = vpop.f32.mrb[0].mxu0
    %v656 = vadd.f32 %v533, %v655
    %v657 = vpop.f32.mrb[0].mxu0
    %v658 = vadd.f32 %v535, %v657
    %v659 = vpop.f32.mrb[0].mxu0
    %v660 = vpop.f32.mrb[0].mxu0
    %661 = vdwg.mxu0
    %v662 = vadd.f32 %v656, %v201
    %v663 = vadd.f32 %v658, %v205
    %v664 = vxor.u32 %v662, 2147483648
    %v665 = vxor.u32 %v663, 2147483648
    %v666 = vmul.f32 %v664, 1.442695
    %v667 = vpow.pop %v666
    %v668 = vmul.f32 %v665, 1.442695
    %v669 = vpow.pop %v668
    %v670 = vadd.f32 %v667, 1.0
    %v671 = vadd.f32 %v669, 1.0
    %v672 = vrcp.pop %v670
    %v673 = vmul.f32 1.0, %v672
    %v674 = vrcp.pop %v671
    %v675 = vmul.f32 1.0, %v674
    %v676 = vtanh.pop %v663
    %v677 = vmul.f32 %v673, %v440
    %v678 = vmul.f32 %v673, %v676
    %680 = vrot.lane.b32.xlu0 %v678, 64
    %v681 = vpop.permute.xlu0 %680
    %v683 = vadd.f32 %v677, %v681
    %v684 = vtanh.pop %v683
    %v685 = vmul.f32 %v675, %v684
    %v686 = vpack.c.bf16 %v685, %v685
    %688 = vrot.lane.b32.xlu0 %v686, 64
    %v689 = vpop.permute.xlu0 %688
    %v691 = vsel %vm256, %v689, 0
    %693 = vmatprep.subr.bf16.mxu0 %v480
    %694 = vmatpush1.bf16.msra.mxu0 %v479
    %695 = vmatprep.subr.bf16.mxu0 %v482
    %696 = vmatpush1.bf16.msra.mxu0 %v481
    %697 = vmatprep.subr.bf16.mxu0 %v484
    %698 = vmatpush1.bf16.msra.mxu0 %v483
    %699 = vmatprep.subr.bf16.mxu0 %v486
    %700 = vmatpush1.bf16.msra.mxu0 %v485
    %701 = vmatprep.subr.bf16.mxu0 0
    %702 = vmatpush1.bf16.msra.mxu0 0
    %703 = vmatprep.subr.bf16.mxu0 0
    %704 = vmatpush1.bf16.msra.mxu0 0
    %705 = vmatprep.subr.bf16.mxu0 0
    %706 = vmatpush1.bf16.msra.mxu0 0
    %707 = vmatprep.subr.bf16.mxu0 0
    %708 = vmatpush1.bf16.msra.mxu0 0
    %709 = vmatprep.subr.bf16.mxu0 0
    %710 = vmatpush1.bf16.msra.mxu0 0
    %711 = vmatprep.subr.bf16.mxu0 0
    %712 = vmatpush1.bf16.msra.mxu0 0
    %713 = vmatprep.subr.bf16.mxu0 0
    %714 = vmatpush1.bf16.msra.mxu0 0
    %715 = vmatprep.subr.bf16.mxu0 0
    %716 = vmatpush1.bf16.msra.mxu0 0
    %717 = vmatprep.subr.bf16.mxu0 0
    %718 = vmatpush1.bf16.msra.mxu0 0
    %719 = vmatprep.subr.bf16.mxu0 0
    %720 = vmatpush1.bf16.msra.mxu0 0
    %721 = vmatprep.subr.bf16.mxu0 0
    %722 = vmatpush1.bf16.msra.mxu0 0
    %723 = vmatprep.subr.bf16.mxu0 0
    %724 = vmatpush1.bf16.msra.mxu0 0
    %725 = vmatprep.mubr.bf16.mxu0 0
    %726 = vmatmul.mubr.bf16.gmra.mrb[0].mxu0 %v691
    %v727 = vpop.f32.mrb[0].mxu0
    %v728 = vadd.f32 0.0, %v727
    %v729 = vpop.f32.mrb[0].mxu0
    %v730 = vadd.f32 0.0, %v729
    %v731 = vpop.f32.mrb[0].mxu0
    %v732 = vpop.f32.mrb[0].mxu0
    %733 = vdwg.mxu0
    %734 = vmatprep.subr.bf16.mxu0 %v241
    %735 = vmatpush1.bf16.msra.mxu0 %v240
    %736 = vmatprep.subr.bf16.mxu0 %v243
    %737 = vmatpush1.bf16.msra.mxu0 %v242
    %738 = vmatprep.subr.bf16.mxu0 %v245
    %739 = vmatpush1.bf16.msra.mxu0 %v244
    %740 = vmatprep.subr.bf16.mxu0 %v247
    %741 = vmatpush1.bf16.msra.mxu0 %v246
    %742 = vmatprep.subr.bf16.mxu0 0
    %743 = vmatpush1.bf16.msra.mxu0 0
    %744 = vmatprep.subr.bf16.mxu0 0
    %745 = vmatpush1.bf16.msra.mxu0 0
    %746 = vmatprep.subr.bf16.mxu0 0
    %747 = vmatpush1.bf16.msra.mxu0 0
    %748 = vmatprep.subr.bf16.mxu0 0
    %749 = vmatpush1.bf16.msra.mxu0 0
    %750 = vmatprep.subr.bf16.mxu0 0
    %751 = vmatpush1.bf16.msra.mxu0 0
    %752 = vmatprep.subr.bf16.mxu0 0
    %753 = vmatpush1.bf16.msra.mxu0 0
    %754 = vmatprep.subr.bf16.mxu0 0
    %755 = vmatpush1.bf16.msra.mxu0 0
    %756 = vmatprep.subr.bf16.mxu0 0
    %757 = vmatpush1.bf16.msra.mxu0 0
    %758 = vmatprep.subr.bf16.mxu0 0
    %759 = vmatpush1.bf16.msra.mxu0 0
    %760 = vmatprep.subr.bf16.mxu0 0
    %761 = vmatpush1.bf16.msra.mxu0 0
    %762 = vmatprep.subr.bf16.mxu0 0
    %763 = vmatpush1.bf16.msra.mxu0 0
    %764 = vmatprep.subr.bf16.mxu0 0
    %765 = vmatpush1.bf16.msra.mxu0 0
    %766 = vmatprep.mubr.bf16.mxu0 0
    %767 = vmatmul.mubr.bf16.gmra.mrb[0].mxu0 %v619
    %v768 = vpop.f32.mrb[0].mxu0
    %v769 = vadd.f32 0.0, %v768
    %v770 = vpop.f32.mrb[0].mxu0
    %v771 = vadd.f32 0.0, %v770
    %v772 = vpop.f32.mrb[0].mxu0
    %v773 = vpop.f32.mrb[0].mxu0
    %774 = vdwg.mxu0
    %v775 = vadd.f32 %v182, %v769
    %v776 = vadd.f32 %v184, %v771
    %v777 = vxor.u32 %v775, 2147483648
    %v778 = vxor.u32 %v776, 2147483648
    %v779 = vmul.f32 %v777, 1.442695
    %v780 = vpow.pop %v779
    %v781 = vmul.f32 %v778, 1.442695
    %v782 = vpow.pop %v781
    %v783 = vadd.f32 %v780, 1.0
    %v784 = vadd.f32 %v782, 1.0
    %v785 = vrcp.pop %v783
    %v786 = vmul.f32 1.0, %v785
    %v787 = vrcp.pop %v784
    %v788 = vmul.f32 1.0, %v787
    %v789 = vtanh.pop %v776
    %v791 = vrot.slane %v610, 4
    %v793 = vmul.f32 %v786, %v791
    %v794 = vmul.f32 %v786, %v789
    %796 = vrot.lane.b32.xlu0 %v794, 64
    %v797 = vpop.permute.xlu0 %796
    %v799 = vadd.f32 %v793, %v797
    %v800 = vtanh.pop %v799
    %v801 = vmul.f32 %v788, %v800
    %v802 = vpack.c.bf16 %v801, %v801
    %804 = vrot.lane.b32.xlu0 %v802, 64
    %v805 = vpop.permute.xlu0 %804
    %v807 = vsel %vm256, %v805, 0
    %809 = vmatprep.subr.bf16.mxu0 %v362
    %810 = vmatpush1.bf16.msra.mxu0 %v361
    %811 = vmatprep.subr.bf16.mxu0 %v364
    %812 = vmatpush1.bf16.msra.mxu0 %v363
    %813 = vmatprep.subr.bf16.mxu0 %v366
    %814 = vmatpush1.bf16.msra.mxu0 %v365
    %815 = vmatprep.subr.bf16.mxu0 %v368
    %816 = vmatpush1.bf16.msra.mxu0 %v367
    %817 = vmatprep.subr.bf16.mxu0 0
    %818 = vmatpush1.bf16.msra.mxu0 0
    %819 = vmatprep.subr.bf16.mxu0 0
    %820 = vmatpush1.bf16.msra.mxu0 0
    %821 = vmatprep.subr.bf16.mxu0 0
    %822 = vmatpush1.bf16.msra.mxu0 0
    %823 = vmatprep.subr.bf16.mxu0 0
    %824 = vmatpush1.bf16.msra.mxu0 0
    %825 = vmatprep.subr.bf16.mxu0 0
    %826 = vmatpush1.bf16.msra.mxu0 0
    %827 = vmatprep.subr.bf16.mxu0 0
    %828 = vmatpush1.bf16.msra.mxu0 0
    %829 = vmatprep.subr.bf16.mxu0 0
    %830 = vmatpush1.bf16.msra.mxu0 0
    %831 = vmatprep.subr.bf16.mxu0 0
    %832 = vmatpush1.bf16.msra.mxu0 0
    %833 = vmatprep.subr.bf16.mxu0 0
    %834 = vmatpush1.bf16.msra.mxu0 0
    %835 = vmatprep.subr.bf16.mxu0 0
    %836 = vmatpush1.bf16.msra.mxu0 0
    %837 = vmatprep.subr.bf16.mxu0 0
    %838 = vmatpush1.bf16.msra.mxu0 0
    %839 = vmatprep.subr.bf16.mxu0 0
    %840 = vmatpush1.bf16.msra.mxu0 0
    %841 = vmatprep.mubr.bf16.mxu0 0
    %842 = vmatmul.mubr.bf16.gmra.mrb[0].mxu0 %v807
    %v843 = vpop.f32.mrb[0].mxu0
    %v844 = vadd.f32 %v728, %v843
    %v845 = vpop.f32.mrb[0].mxu0
    %v846 = vadd.f32 %v730, %v845
    %v847 = vpop.f32.mrb[0].mxu0
    %v848 = vpop.f32.mrb[0].mxu0
    %849 = vdwg.mxu0
    %v850 = vadd.f32 %v844, %v201
    %v851 = vadd.f32 %v846, %v205
    %v852 = vxor.u32 %v850, 2147483648
    %v853 = vxor.u32 %v851, 2147483648
    %v854 = vmul.f32 %v852, 1.442695
    %v855 = vpow.pop %v854
    %v856 = vmul.f32 %v853, 1.442695
    %v857 = vpow.pop %v856
    %v858 = vadd.f32 %v855, 1.0
    %v859 = vadd.f32 %v857, 1.0
    %v860 = vrcp.pop %v858
    %v861 = vmul.f32 1.0, %v860
    %v862 = vrcp.pop %v859
    %v863 = vmul.f32 1.0, %v862
    %v864 = vtanh.pop %v851
    %v865 = vmul.f32 %v861, %v683
    %v866 = vmul.f32 %v861, %v864
    %868 = vrot.lane.b32.xlu0 %v866, 64
    %v869 = vpop.permute.xlu0 %868
    %v871 = vadd.f32 %v865, %v869
    %v872 = vtanh.pop %v871
    %v873 = vmul.f32 %v863, %v872
    %v874 = vpack.c.bf16 %v873, %v873
    %876 = vrot.lane.b32.xlu0 %v874, 64
    %v877 = vpop.permute.xlu0 %876
    %v879 = vsel %vm256, %v877, 0
    %881 = vmatprep.subr.bf16.mxu0 %v480
    %882 = vmatpush1.bf16.msra.mxu0 %v479
    %883 = vmatprep.subr.bf16.mxu0 %v482
    %884 = vmatpush1.bf16.msra.mxu0 %v481
    %885 = vmatprep.subr.bf16.mxu0 %v484
    %886 = vmatpush1.bf16.msra.mxu0 %v483
    %887 = vmatprep.subr.bf16.mxu0 %v486
    %888 = vmatpush1.bf16.msra.mxu0 %v485
    %889 = vmatprep.subr.bf16.mxu0 0
    %890 = vmatpush1.bf16.msra.mxu0 0
    %891 = vmatprep.subr.bf16.mxu0 0
    %892 = vmatpush1.bf16.msra.mxu0 0
    %893 = vmatprep.subr.bf16.mxu0 0
    %894 = vmatpush1.bf16.msra.mxu0 0
    %895 = vmatprep.subr.bf16.mxu0 0
    %896 = vmatpush1.bf16.msra.mxu0 0
    %897 = vmatprep.subr.bf16.mxu0 0
    %898 = vmatpush1.bf16.msra.mxu0 0
    %899 = vmatprep.subr.bf16.mxu0 0
    %900 = vmatpush1.bf16.msra.mxu0 0
    %901 = vmatprep.subr.bf16.mxu0 0
    %902 = vmatpush1.bf16.msra.mxu0 0
    %903 = vmatprep.subr.bf16.mxu0 0
    %904 = vmatpush1.bf16.msra.mxu0 0
    %905 = vmatprep.subr.bf16.mxu0 0
    %906 = vmatpush1.bf16.msra.mxu0 0
    %907 = vmatprep.subr.bf16.mxu0 0
    %908 = vmatpush1.bf16.msra.mxu0 0
    %909 = vmatprep.subr.bf16.mxu0 0
    %910 = vmatpush1.bf16.msra.mxu0 0
    %911 = vmatprep.subr.bf16.mxu0 0
    %912 = vmatpush1.bf16.msra.mxu0 0
    %913 = vmatprep.mubr.bf16.mxu0 0
    %914 = vmatmul.mubr.bf16.gmra.mrb[0].mxu0 %v879
    %v915 = vpop.f32.mrb[0].mxu0
    %v916 = vadd.f32 0.0, %v915
    %v917 = vpop.f32.mrb[0].mxu0
    %v918 = vadd.f32 0.0, %v917
    %v919 = vpop.f32.mrb[0].mxu0
    %v920 = vpop.f32.mrb[0].mxu0
    %921 = vdwg.mxu0
    %922 = vmatprep.subr.bf16.mxu0 %v241
    %923 = vmatpush1.bf16.msra.mxu0 %v240
    %924 = vmatprep.subr.bf16.mxu0 %v243
    %925 = vmatpush1.bf16.msra.mxu0 %v242
    %926 = vmatprep.subr.bf16.mxu0 %v245
    %927 = vmatpush1.bf16.msra.mxu0 %v244
    %928 = vmatprep.subr.bf16.mxu0 %v247
    %929 = vmatpush1.bf16.msra.mxu0 %v246
    %930 = vmatprep.subr.bf16.mxu0 0
    %931 = vmatpush1.bf16.msra.mxu0 0
    %932 = vmatprep.subr.bf16.mxu0 0
    %933 = vmatpush1.bf16.msra.mxu0 0
    %934 = vmatprep.subr.bf16.mxu0 0
    %935 = vmatpush1.bf16.msra.mxu0 0
    %936 = vmatprep.subr.bf16.mxu0 0
    %937 = vmatpush1.bf16.msra.mxu0 0
    %938 = vmatprep.subr.bf16.mxu0 0
    %939 = vmatpush1.bf16.msra.mxu0 0
    %940 = vmatprep.subr.bf16.mxu0 0
    %941 = vmatpush1.bf16.msra.mxu0 0
    %942 = vmatprep.subr.bf16.mxu0 0
    %943 = vmatpush1.bf16.msra.mxu0 0
    %944 = vmatprep.subr.bf16.mxu0 0
    %945 = vmatpush1.bf16.msra.mxu0 0
    %946 = vmatprep.subr.bf16.mxu0 0
    %947 = vmatpush1.bf16.msra.mxu0 0
    %948 = vmatprep.subr.bf16.mxu0 0
    %949 = vmatpush1.bf16.msra.mxu0 0
    %950 = vmatprep.subr.bf16.mxu0 0
    %951 = vmatpush1.bf16.msra.mxu0 0
    %952 = vmatprep.subr.bf16.mxu0 0
    %953 = vmatpush1.bf16.msra.mxu0 0
    %954 = vmatprep.mubr.bf16.mxu0 0
    %955 = vmatmul.mubr.bf16.gmra.mrb[0].mxu0 %v807
    %v956 = vpop.f32.mrb[0].mxu0
    %v957 = vadd.f32 0.0, %v956
    %v958 = vpop.f32.mrb[0].mxu0
    %v959 = vadd.f32 0.0, %v958
    %v960 = vpop.f32.mrb[0].mxu0
    %v961 = vpop.f32.mrb[0].mxu0
    %962 = vdwg.mxu0
    %v965 = vrot.slane %v957, 4
    %v966 = vrot.slane %v959, 4
    %v969 = vadd.f32 %v182, %v965
    %v970 = vadd.f32 %v184, %v966
    %v971 = vxor.u32 %v969, 2147483648
    %v972 = vxor.u32 %v970, 2147483648
    %v973 = vmul.f32 %v971, 1.442695
    %v974 = vpow.pop %v973
    %v975 = vmul.f32 %v972, 1.442695
    %v976 = vpow.pop %v975
    %v977 = vadd.f32 %v974, 1.0
    %v978 = vadd.f32 %v976, 1.0
    %v979 = vrcp.pop %v977
    %v980 = vmul.f32 1.0, %v979
    %v981 = vrcp.pop %v978
    %v982 = vmul.f32 1.0, %v981
    %v983 = vtanh.pop %v970
    %v985 = vrot.slane %v799, 4
    %v987 = vmul.f32 %v980, %v985
    %v988 = vmul.f32 %v980, %v983
    %990 = vrot.lane.b32.xlu0 %v988, 64
    %v991 = vpop.permute.xlu0 %990
    %v993 = vadd.f32 %v987, %v991
    %v994 = vtanh.pop %v993
    %v995 = vmul.f32 %v982, %v994
    %v996 = vpack.c.bf16 %v995, %v995
    %v998 = vrot.slane %v996, 2
    %999 = vrot.lane.b32.xlu0 %v998, 64
    %v1000 = vpop.permute.xlu0 %999
    %v1002 = vsel %vm256, %v1000, 0
    %1004 = vmatprep.subr.bf16.mxu0 %v362
    %1005 = vmatpush1.bf16.msra.mxu0 %v361
    %1006 = vmatprep.subr.bf16.mxu0 %v364
    %1007 = vmatpush1.bf16.msra.mxu0 %v363
    %1008 = vmatprep.subr.bf16.mxu0 %v366
    %1009 = vmatpush1.bf16.msra.mxu0 %v365
    %1010 = vmatprep.subr.bf16.mxu0 %v368
    %1011 = vmatpush1.bf16.msra.mxu0 %v367
    %1012 = vmatprep.subr.bf16.mxu0 0
    %1013 = vmatpush1.bf16.msra.mxu0 0
    %1014 = vmatprep.subr.bf16.mxu0 0
    %1015 = vmatpush1.bf16.msra.mxu0 0
    %1016 = vmatprep.subr.bf16.mxu0 0
    %1017 = vmatpush1.bf16.msra.mxu0 0
    %1018 = vmatprep.subr.bf16.mxu0 0
    %1019 = vmatpush1.bf16.msra.mxu0 0
    %1020 = vmatprep.subr.bf16.mxu0 0
    %1021 = vmatpush1.bf16.msra.mxu0 0
    %1022 = vmatprep.subr.bf16.mxu0 0
    %1023 = vmatpush1.bf16.msra.mxu0 0
    %1024 = vmatprep.subr.bf16.mxu0 0
    %1025 = vmatpush1.bf16.msra.mxu0 0
    %1026 = vmatprep.subr.bf16.mxu0 0
    %1027 = vmatpush1.bf16.msra.mxu0 0
    %1028 = vmatprep.subr.bf16.mxu0 0
    %1029 = vmatpush1.bf16.msra.mxu0 0
    %1030 = vmatprep.subr.bf16.mxu0 0
    %1031 = vmatpush1.bf16.msra.mxu0 0
    %1032 = vmatprep.subr.bf16.mxu0 0
    %1033 = vmatpush1.bf16.msra.mxu0 0
    %1034 = vmatprep.subr.bf16.mxu0 0
    %1035 = vmatpush1.bf16.msra.mxu0 0
    %1036 = vmatprep.mubr.bf16.mxu0 0
    %1037 = vmatmul.mubr.bf16.gmra.mrb[0].mxu0 %v1002
    %v1038 = vpop.f32.mrb[0].mxu0
    %v1039 = vadd.f32 %v916, %v1038
    %v1040 = vpop.f32.mrb[0].mxu0
    %v1041 = vadd.f32 %v918, %v1040
    %v1042 = vpop.f32.mrb[0].mxu0
    %v1043 = vpop.f32.mrb[0].mxu0
    %1044 = vdwg.mxu0
    %v1045 = vadd.f32 %v1039, %v201
    %v1046 = vadd.f32 %v1041, %v205
    %v1047 = vxor.u32 %v1045, 2147483648
    %v1048 = vxor.u32 %v1046, 2147483648
    %v1049 = vmul.f32 %v1047, 1.442695
    %v1050 = vpow.pop %v1049
    %v1051 = vmul.f32 %v1048, 1.442695
    %v1052 = vpow.pop %v1051
    %v1053 = vadd.f32 %v1050, 1.0
    %v1054 = vadd.f32 %v1052, 1.0
    %v1055 = vrcp.pop %v1053
    %v1056 = vmul.f32 1.0, %v1055
    %v1057 = vrcp.pop %v1054
    %v1058 = vmul.f32 1.0, %v1057
    %v1059 = vtanh.pop %v1046
    %v1060 = vmul.f32 %v1056, %v871
    %v1061 = vmul.f32 %v1056, %v1059
    %1063 = vrot.lane.b32.xlu0 %v1061, 64
    %v1064 = vpop.permute.xlu0 %1063
    %v1066 = vadd.f32 %v1060, %v1064
    %v1067 = vtanh.pop %v1066
    %v1068 = vmul.f32 %v1058, %v1067
    %v1069 = vpack.c.bf16 %v1068, %v1068
    %1071 = vrot.lane.b32.xlu0 %v1069, 64
    %v1072 = vpop.permute.xlu0 %1071
    %v1074 = vsel %vm256, %v1072, 0
    %1076 = vmatprep.subr.bf16.mxu0 %v480
    %1077 = vmatpush1.bf16.msra.mxu0 %v479
    %1078 = vmatprep.subr.bf16.mxu0 %v482
    %1079 = vmatpush1.bf16.msra.mxu0 %v481
    %1080 = vmatprep.subr.bf16.mxu0 %v484
    %1081 = vmatpush1.bf16.msra.mxu0 %v483
    %1082 = vmatprep.subr.bf16.mxu0 %v486
    %1083 = vmatpush1.bf16.msra.mxu0 %v485
    %1084 = vmatprep.subr.bf16.mxu0 0
    %1085 = vmatpush1.bf16.msra.mxu0 0
    %1086 = vmatprep.subr.bf16.mxu0 0
    %1087 = vmatpush1.bf16.msra.mxu0 0
    %1088 = vmatprep.subr.bf16.mxu0 0
    %1089 = vmatpush1.bf16.msra.mxu0 0
    %1090 = vmatprep.subr.bf16.mxu0 0
    %1091 = vmatpush1.bf16.msra.mxu0 0
    %1092 = vmatprep.subr.bf16.mxu0 0
    %1093 = vmatpush1.bf16.msra.mxu0 0
    %1094 = vmatprep.subr.bf16.mxu0 0
    %1095 = vmatpush1.bf16.msra.mxu0 0
    %1096 = vmatprep.subr.bf16.mxu0 0
    %1097 = vmatpush1.bf16.msra.mxu0 0
    %1098 = vmatprep.subr.bf16.mxu0 0
    %1099 = vmatpush1.bf16.msra.mxu0 0
    %1100 = vmatprep.subr.bf16.mxu0 0
    %1101 = vmatpush1.bf16.msra.mxu0 0
    %1102 = vmatprep.subr.bf16.mxu0 0
    %1103 = vmatpush1.bf16.msra.mxu0 0
    %1104 = vmatprep.subr.bf16.mxu0 0
    %1105 = vmatpush1.bf16.msra.mxu0 0
    %1106 = vmatprep.subr.bf16.mxu0 0
    %1107 = vmatpush1.bf16.msra.mxu0 0
    %1108 = vmatprep.mubr.bf16.mxu0 0
    %1109 = vmatmul.mubr.bf16.gmra.mrb[0].mxu0 %v1074
    %v1110 = vpop.f32.mrb[0].mxu0
    %v1111 = vadd.f32 0.0, %v1110
    %v1112 = vpop.f32.mrb[0].mxu0
    %v1113 = vadd.f32 0.0, %v1112
    %v1114 = vpop.f32.mrb[0].mxu0
    %v1115 = vpop.f32.mrb[0].mxu0
    %1116 = vdwg.mxu0
    %1117 = vmatprep.subr.bf16.mxu0 %v241
    %1118 = vmatpush1.bf16.msra.mxu0 %v240
    %1119 = vmatprep.subr.bf16.mxu0 %v243
    %1120 = vmatpush1.bf16.msra.mxu0 %v242
    %1121 = vmatprep.subr.bf16.mxu0 %v245
    %1122 = vmatpush1.bf16.msra.mxu0 %v244
    %1123 = vmatprep.subr.bf16.mxu0 %v247
    %1124 = vmatpush1.bf16.msra.mxu0 %v246
    %1125 = vmatprep.subr.bf16.mxu0 0
    %1126 = vmatpush1.bf16.msra.mxu0 0
    %1127 = vmatprep.subr.bf16.mxu0 0
    %1128 = vmatpush1.bf16.msra.mxu0 0
    %1129 = vmatprep.subr.bf16.mxu0 0
    %1130 = vmatpush1.bf16.msra.mxu0 0
    %1131 = vmatprep.subr.bf16.mxu0 0
    %1132 = vmatpush1.bf16.msra.mxu0 0
    %1133 = vmatprep.subr.bf16.mxu0 0
    %1134 = vmatpush1.bf16.msra.mxu0 0
    %1135 = vmatprep.subr.bf16.mxu0 0
    %1136 = vmatpush1.bf16.msra.mxu0 0
    %1137 = vmatprep.subr.bf16.mxu0 0
    %1138 = vmatpush1.bf16.msra.mxu0 0
    %1139 = vmatprep.subr.bf16.mxu0 0
    %1140 = vmatpush1.bf16.msra.mxu0 0
    %1141 = vmatprep.subr.bf16.mxu0 0
    %1142 = vmatpush1.bf16.msra.mxu0 0
    %1143 = vmatprep.subr.bf16.mxu0 0
    %1144 = vmatpush1.bf16.msra.mxu0 0
    %1145 = vmatprep.subr.bf16.mxu0 0
    %1146 = vmatpush1.bf16.msra.mxu0 0
    %1147 = vmatprep.subr.bf16.mxu0 0
    %1148 = vmatpush1.bf16.msra.mxu0 0
    %1149 = vmatprep.mubr.bf16.mxu0 0
    %1150 = vmatmul.mubr.bf16.gmra.mrb[0].mxu0 %v1002
    %v1151 = vpop.f32.mrb[0].mxu0
    %v1152 = vadd.f32 0.0, %v1151
    %v1153 = vpop.f32.mrb[0].mxu0
    %v1154 = vadd.f32 0.0, %v1153
    %v1155 = vpop.f32.mrb[0].mxu0
    %v1156 = vpop.f32.mrb[0].mxu0
    %1157 = vdwg.mxu0
    %v1158 = vadd.f32 %v188, %v1152
    %v1159 = vadd.f32 %v190, %v1154
    %v1160 = vxor.u32 %v1158, 2147483648
    %v1161 = vxor.u32 %v1159, 2147483648
    %v1162 = vmul.f32 %v1160, 1.442695
    %v1163 = vpow.pop %v1162
    %v1164 = vmul.f32 %v1161, 1.442695
    %v1165 = vpow.pop %v1164
    %v1166 = vadd.f32 %v1163, 1.0
    %v1167 = vadd.f32 %v1165, 1.0
    %v1168 = vrcp.pop %v1166
    %v1169 = vmul.f32 1.0, %v1168
    %v1170 = vrcp.pop %v1167
    %v1171 = vmul.f32 1.0, %v1170
    %v1172 = vtanh.pop %v1159
    %v1174 = vrot.slane %v993, 4
    %v1176 = vmul.f32 %v1169, %v1174
    %v1177 = vmul.f32 %v1169, %v1172
    %1179 = vrot.lane.b32.xlu0 %v1177, 64
    %v1180 = vpop.permute.xlu0 %1179
    %v1182 = vadd.f32 %v1176, %v1180
    %v1183 = vtanh.pop %v1182
    %v1184 = vmul.f32 %v1171, %v1183
    %v1185 = vpack.c.bf16 %v1184, %v1184
    %1187 = vrot.lane.b32.xlu0 %v1185, 64
    %v1188 = vpop.permute.xlu0 %1187
    %v1190 = vsel %vm256, %v1188, 0
    %1192 = vmatprep.subr.bf16.mxu0 %v362
    %1193 = vmatpush1.bf16.msra.mxu0 %v361
    %1194 = vmatprep.subr.bf16.mxu0 %v364
    %1195 = vmatpush1.bf16.msra.mxu0 %v363
    %1196 = vmatprep.subr.bf16.mxu0 %v366
    %1197 = vmatpush1.bf16.msra.mxu0 %v365
    %1198 = vmatprep.subr.bf16.mxu0 %v368
    %1199 = vmatpush1.bf16.msra.mxu0 %v367
    %1200 = vmatprep.subr.bf16.mxu0 0
    %1201 = vmatpush1.bf16.msra.mxu0 0
    %1202 = vmatprep.subr.bf16.mxu0 0
    %1203 = vmatpush1.bf16.msra.mxu0 0
    %1204 = vmatprep.subr.bf16.mxu0 0
    %1205 = vmatpush1.bf16.msra.mxu0 0
    %1206 = vmatprep.subr.bf16.mxu0 0
    %1207 = vmatpush1.bf16.msra.mxu0 0
    %1208 = vmatprep.subr.bf16.mxu0 0
    %1209 = vmatpush1.bf16.msra.mxu0 0
    %1210 = vmatprep.subr.bf16.mxu0 0
    %1211 = vmatpush1.bf16.msra.mxu0 0
    %1212 = vmatprep.subr.bf16.mxu0 0
    %1213 = vmatpush1.bf16.msra.mxu0 0
    %1214 = vmatprep.subr.bf16.mxu0 0
    %1215 = vmatpush1.bf16.msra.mxu0 0
    %1216 = vmatprep.subr.bf16.mxu0 0
    %1217 = vmatpush1.bf16.msra.mxu0 0
    %1218 = vmatprep.subr.bf16.mxu0 0
    %1219 = vmatpush1.bf16.msra.mxu0 0
    %1220 = vmatprep.subr.bf16.mxu0 0
    %1221 = vmatpush1.bf16.msra.mxu0 0
    %1222 = vmatprep.subr.bf16.mxu0 0
    %1223 = vmatpush1.bf16.msra.mxu0 0
    %1224 = vmatprep.mubr.bf16.mxu0 0
    %1225 = vmatmul.mubr.bf16.gmra.mrb[0].mxu0 %v1190
    %v1226 = vpop.f32.mrb[0].mxu0
    %v1227 = vadd.f32 %v1111, %v1226
    %v1228 = vpop.f32.mrb[0].mxu0
    %v1229 = vadd.f32 %v1113, %v1228
    %v1230 = vpop.f32.mrb[0].mxu0
    %v1231 = vpop.f32.mrb[0].mxu0
    %1232 = vdwg.mxu0
    %v1233 = vadd.f32 %v1227, %v201
    %v1234 = vadd.f32 %v1229, %v205
    %v1235 = vxor.u32 %v1233, 2147483648
    %v1236 = vxor.u32 %v1234, 2147483648
    %v1237 = vmul.f32 %v1235, 1.442695
    %v1238 = vpow.pop %v1237
    %v1239 = vmul.f32 %v1236, 1.442695
    %v1240 = vpow.pop %v1239
    %v1241 = vadd.f32 %v1238, 1.0
    %v1242 = vadd.f32 %v1240, 1.0
    %v1243 = vrcp.pop %v1241
    %v1244 = vmul.f32 1.0, %v1243
    %v1245 = vrcp.pop %v1242
    %v1246 = vmul.f32 1.0, %v1245
    %v1247 = vtanh.pop %v1234
    %v1248 = vmul.f32 %v1244, %v1066
    %v1249 = vmul.f32 %v1244, %v1247
    %1251 = vrot.lane.b32.xlu0 %v1249, 64
    %v1252 = vpop.permute.xlu0 %1251
    %v1254 = vadd.f32 %v1248, %v1252
    %v1255 = vtanh.pop %v1254
    %v1256 = vmul.f32 %v1246, %v1255
    %v1257 = vpack.c.bf16 %v1256, %v1256
    %1259 = vrot.lane.b32.xlu0 %v1257, 64
    %v1260 = vpop.permute.xlu0 %1259
    %v1262 = vsel %vm256, %v1260, 0
    %1264 = vmatprep.subr.bf16.mxu0 %v480
    %1265 = vmatpush1.bf16.msra.mxu0 %v479
    %1266 = vmatprep.subr.bf16.mxu0 %v482
    %1267 = vmatpush1.bf16.msra.mxu0 %v481
    %1268 = vmatprep.subr.bf16.mxu0 %v484
    %1269 = vmatpush1.bf16.msra.mxu0 %v483
    %1270 = vmatprep.subr.bf16.mxu0 %v486
    %1271 = vmatpush1.bf16.msra.mxu0 %v485
    %1272 = vmatprep.subr.bf16.mxu0 0
    %1273 = vmatpush1.bf16.msra.mxu0 0
    %1274 = vmatprep.subr.bf16.mxu0 0
    %1275 = vmatpush1.bf16.msra.mxu0 0
    %1276 = vmatprep.subr.bf16.mxu0 0
    %1277 = vmatpush1.bf16.msra.mxu0 0
    %1278 = vmatprep.subr.bf16.mxu0 0
    %1279 = vmatpush1.bf16.msra.mxu0 0
    %1280 = vmatprep.subr.bf16.mxu0 0
    %1281 = vmatpush1.bf16.msra.mxu0 0
    %1282 = vmatprep.subr.bf16.mxu0 0
    %1283 = vmatpush1.bf16.msra.mxu0 0
    %1284 = vmatprep.subr.bf16.mxu0 0
    %1285 = vmatpush1.bf16.msra.mxu0 0
    %1286 = vmatprep.subr.bf16.mxu0 0
    %1287 = vmatpush1.bf16.msra.mxu0 0
    %1288 = vmatprep.subr.bf16.mxu0 0
    %1289 = vmatpush1.bf16.msra.mxu0 0
    %1290 = vmatprep.subr.bf16.mxu0 0
    %1291 = vmatpush1.bf16.msra.mxu0 0
    %1292 = vmatprep.subr.bf16.mxu0 0
    %1293 = vmatpush1.bf16.msra.mxu0 0
    %1294 = vmatprep.subr.bf16.mxu0 0
    %1295 = vmatpush1.bf16.msra.mxu0 0
    %1296 = vmatprep.mubr.bf16.mxu0 0
    %1297 = vmatmul.mubr.bf16.gmra.mrb[0].mxu0 %v1262
    %v1298 = vpop.f32.mrb[0].mxu0
    %v1299 = vadd.f32 0.0, %v1298
    %v1300 = vpop.f32.mrb[0].mxu0
    %v1301 = vadd.f32 0.0, %v1300
    %v1302 = vpop.f32.mrb[0].mxu0
    %v1303 = vpop.f32.mrb[0].mxu0
    %1304 = vdwg.mxu0
    %1305 = vmatprep.subr.bf16.mxu0 %v241
    %1306 = vmatpush1.bf16.msra.mxu0 %v240
    %1307 = vmatprep.subr.bf16.mxu0 %v243
    %1308 = vmatpush1.bf16.msra.mxu0 %v242
    %1309 = vmatprep.subr.bf16.mxu0 %v245
    %1310 = vmatpush1.bf16.msra.mxu0 %v244
    %1311 = vmatprep.subr.bf16.mxu0 %v247
    %1312 = vmatpush1.bf16.msra.mxu0 %v246
    %1313 = vmatprep.subr.bf16.mxu0 0
    %1314 = vmatpush1.bf16.msra.mxu0 0
    %1315 = vmatprep.subr.bf16.mxu0 0
    %1316 = vmatpush1.bf16.msra.mxu0 0
    %1317 = vmatprep.subr.bf16.mxu0 0
    %1318 = vmatpush1.bf16.msra.mxu0 0
    %1319 = vmatprep.subr.bf16.mxu0 0
    %1320 = vmatpush1.bf16.msra.mxu0 0
    %1321 = vmatprep.subr.bf16.mxu0 0
    %1322 = vmatpush1.bf16.msra.mxu0 0
    %1323 = vmatprep.subr.bf16.mxu0 0
    %1324 = vmatpush1.bf16.msra.mxu0 0
    %1325 = vmatprep.subr.bf16.mxu0 0
    %1326 = vmatpush1.bf16.msra.mxu0 0
    %1327 = vmatprep.subr.bf16.mxu0 0
    %1328 = vmatpush1.bf16.msra.mxu0 0
    %1329 = vmatprep.subr.bf16.mxu0 0
    %1330 = vmatpush1.bf16.msra.mxu0 0
    %1331 = vmatprep.subr.bf16.mxu0 0
    %1332 = vmatpush1.bf16.msra.mxu0 0
    %1333 = vmatprep.subr.bf16.mxu0 0
    %1334 = vmatpush1.bf16.msra.mxu0 0
    %1335 = vmatprep.subr.bf16.mxu0 0
    %1336 = vmatpush1.bf16.msra.mxu0 0
    %1337 = vmatprep.mubr.bf16.mxu0 0
    %1338 = vmatmul.mubr.bf16.gmra.mrb[0].mxu0 %v1190
    %v1339 = vpop.f32.mrb[0].mxu0
    %v1340 = vadd.f32 0.0, %v1339
    %v1341 = vpop.f32.mrb[0].mxu0
    %v1342 = vadd.f32 0.0, %v1341
    %v1343 = vpop.f32.mrb[0].mxu0
    %v1344 = vpop.f32.mrb[0].mxu0
    %1345 = vdwg.mxu0
    %v1348 = vrot.slane %v1340, 4
    %v1349 = vrot.slane %v1342, 4
    %v1352 = vadd.f32 %v188, %v1348
    %v1353 = vadd.f32 %v190, %v1349
    %v1354 = vxor.u32 %v1352, 2147483648
    %v1355 = vxor.u32 %v1353, 2147483648
    %v1356 = vmul.f32 %v1354, 1.442695
    %v1357 = vpow.pop %v1356
    %v1358 = vmul.f32 %v1355, 1.442695
    %v1359 = vpow.pop %v1358
    %v1360 = vadd.f32 %v1357, 1.0
    %v1361 = vadd.f32 %v1359, 1.0
    %v1362 = vrcp.pop %v1360
    %v1363 = vmul.f32 1.0, %v1362
    %v1364 = vrcp.pop %v1361
    %v1365 = vmul.f32 1.0, %v1364
    %v1366 = vtanh.pop %v1353
    %v1368 = vrot.slane %v1182, 4
    %v1370 = vmul.f32 %v1363, %v1368
    %v1371 = vmul.f32 %v1363, %v1366
    %1373 = vrot.lane.b32.xlu0 %v1371, 64
    %v1374 = vpop.permute.xlu0 %1373
    %v1376 = vadd.f32 %v1370, %v1374
    %v1377 = vtanh.pop %v1376
    %v1378 = vmul.f32 %v1365, %v1377
    %v1379 = vpack.c.bf16 %v1378, %v1378
    %v1381 = vrot.slane %v1379, 2
    %1382 = vrot.lane.b32.xlu0 %v1381, 64
    %v1383 = vpop.permute.xlu0 %1382
    %v1385 = vsel %vm256, %v1383, 0
    %1387 = vmatprep.subr.bf16.mxu0 %v362
    %1388 = vmatpush1.bf16.msra.mxu0 %v361
    %1389 = vmatprep.subr.bf16.mxu0 %v364
    %1390 = vmatpush1.bf16.msra.mxu0 %v363
    %1391 = vmatprep.subr.bf16.mxu0 %v366
    %1392 = vmatpush1.bf16.msra.mxu0 %v365
    %1393 = vmatprep.subr.bf16.mxu0 %v368
    %1394 = vmatpush1.bf16.msra.mxu0 %v367
    %1395 = vmatprep.subr.bf16.mxu0 0
    %1396 = vmatpush1.bf16.msra.mxu0 0
    %1397 = vmatprep.subr.bf16.mxu0 0
    %1398 = vmatpush1.bf16.msra.mxu0 0
    %1399 = vmatprep.subr.bf16.mxu0 0
    %1400 = vmatpush1.bf16.msra.mxu0 0
    %1401 = vmatprep.subr.bf16.mxu0 0
    %1402 = vmatpush1.bf16.msra.mxu0 0
    %1403 = vmatprep.subr.bf16.mxu0 0
    %1404 = vmatpush1.bf16.msra.mxu0 0
    %1405 = vmatprep.subr.bf16.mxu0 0
    %1406 = vmatpush1.bf16.msra.mxu0 0
    %1407 = vmatprep.subr.bf16.mxu0 0
    %1408 = vmatpush1.bf16.msra.mxu0 0
    %1409 = vmatprep.subr.bf16.mxu0 0
    %1410 = vmatpush1.bf16.msra.mxu0 0
    %1411 = vmatprep.subr.bf16.mxu0 0
    %1412 = vmatpush1.bf16.msra.mxu0 0
    %1413 = vmatprep.subr.bf16.mxu0 0
    %1414 = vmatpush1.bf16.msra.mxu0 0
    %1415 = vmatprep.subr.bf16.mxu0 0
    %1416 = vmatpush1.bf16.msra.mxu0 0
    %1417 = vmatprep.subr.bf16.mxu0 0
    %1418 = vmatpush1.bf16.msra.mxu0 0
    %1419 = vmatprep.mubr.bf16.mxu0 0
    %1420 = vmatmul.mubr.bf16.gmra.mrb[0].mxu0 %v1385
    %v1421 = vpop.f32.mrb[0].mxu0
    %v1422 = vadd.f32 %v1299, %v1421
    %v1423 = vpop.f32.mrb[0].mxu0
    %v1424 = vadd.f32 %v1301, %v1423
    %v1425 = vpop.f32.mrb[0].mxu0
    %v1426 = vpop.f32.mrb[0].mxu0
    %1427 = vdwg.mxu0
    %v1428 = vadd.f32 %v1422, %v201
    %v1429 = vadd.f32 %v1424, %v205
    %v1430 = vxor.u32 %v1428, 2147483648
    %v1431 = vxor.u32 %v1429, 2147483648
    %v1432 = vmul.f32 %v1430, 1.442695
    %v1433 = vpow.pop %v1432
    %v1434 = vmul.f32 %v1431, 1.442695
    %v1435 = vpow.pop %v1434
    %v1436 = vadd.f32 %v1433, 1.0
    %v1437 = vadd.f32 %v1435, 1.0
    %v1438 = vrcp.pop %v1436
    %v1439 = vmul.f32 1.0, %v1438
    %v1440 = vrcp.pop %v1437
    %v1441 = vmul.f32 1.0, %v1440
    %v1442 = vtanh.pop %v1429
    %v1443 = vmul.f32 %v1439, %v1254
    %v1444 = vmul.f32 %v1439, %v1442
    %1446 = vrot.lane.b32.xlu0 %v1444, 64
    %v1447 = vpop.permute.xlu0 %1446
    %v1449 = vadd.f32 %v1443, %v1447
    %v1450 = vtanh.pop %v1449
    %v1451 = vmul.f32 %v1441, %v1450
    %v1452 = vpack.c.bf16 %v1451, %v1451
    %1454 = vrot.lane.b32.xlu0 %v1452, 64
    %v1455 = vpop.permute.xlu0 %1454
    %v1457 = vsel %vm256, %v1455, 0
    %1459 = vmatprep.subr.bf16.mxu0 %v480
    %1460 = vmatpush1.bf16.msra.mxu0 %v479
    %1461 = vmatprep.subr.bf16.mxu0 %v482
    %1462 = vmatpush1.bf16.msra.mxu0 %v481
    %1463 = vmatprep.subr.bf16.mxu0 %v484
    %1464 = vmatpush1.bf16.msra.mxu0 %v483
    %1465 = vmatprep.subr.bf16.mxu0 %v486
    %1466 = vmatpush1.bf16.msra.mxu0 %v485
    %1467 = vmatprep.subr.bf16.mxu0 0
    %1468 = vmatpush1.bf16.msra.mxu0 0
    %1469 = vmatprep.subr.bf16.mxu0 0
    %1470 = vmatpush1.bf16.msra.mxu0 0
    %1471 = vmatprep.subr.bf16.mxu0 0
    %1472 = vmatpush1.bf16.msra.mxu0 0
    %1473 = vmatprep.subr.bf16.mxu0 0
    %1474 = vmatpush1.bf16.msra.mxu0 0
    %1475 = vmatprep.subr.bf16.mxu0 0
    %1476 = vmatpush1.bf16.msra.mxu0 0
    %1477 = vmatprep.subr.bf16.mxu0 0
    %1478 = vmatpush1.bf16.msra.mxu0 0
    %1479 = vmatprep.subr.bf16.mxu0 0
    %1480 = vmatpush1.bf16.msra.mxu0 0
    %1481 = vmatprep.subr.bf16.mxu0 0
    %1482 = vmatpush1.bf16.msra.mxu0 0
    %1483 = vmatprep.subr.bf16.mxu0 0
    %1484 = vmatpush1.bf16.msra.mxu0 0
    %1485 = vmatprep.subr.bf16.mxu0 0
    %1486 = vmatpush1.bf16.msra.mxu0 0
    %1487 = vmatprep.subr.bf16.mxu0 0
    %1488 = vmatpush1.bf16.msra.mxu0 0
    %1489 = vmatprep.subr.bf16.mxu0 0
    %1490 = vmatpush1.bf16.msra.mxu0 0
    %1491 = vmatprep.mubr.bf16.mxu0 0
    %1492 = vmatmul.mubr.bf16.gmra.mrb[0].mxu0 %v1457
    %v1493 = vpop.f32.mrb[0].mxu0
    %v1494 = vadd.f32 0.0, %v1493
    %v1495 = vpop.f32.mrb[0].mxu0
    %v1496 = vadd.f32 0.0, %v1495
    %v1497 = vpop.f32.mrb[0].mxu0
    %v1498 = vpop.f32.mrb[0].mxu0
    %1499 = vdwg.mxu0
    %1500 = vmatprep.subr.bf16.mxu0 %v241
    %1501 = vmatpush1.bf16.msra.mxu0 %v240
    %1502 = vmatprep.subr.bf16.mxu0 %v243
    %1503 = vmatpush1.bf16.msra.mxu0 %v242
    %1504 = vmatprep.subr.bf16.mxu0 %v245
    %1505 = vmatpush1.bf16.msra.mxu0 %v244
    %1506 = vmatprep.subr.bf16.mxu0 %v247
    %1507 = vmatpush1.bf16.msra.mxu0 %v246
    %1508 = vmatprep.subr.bf16.mxu0 0
    %1509 = vmatpush1.bf16.msra.mxu0 0
    %1510 = vmatprep.subr.bf16.mxu0 0
    %1511 = vmatpush1.bf16.msra.mxu0 0
    %1512 = vmatprep.subr.bf16.mxu0 0
    %1513 = vmatpush1.bf16.msra.mxu0 0
    %1514 = vmatprep.subr.bf16.mxu0 0
    %1515 = vmatpush1.bf16.msra.mxu0 0
    %1516 = vmatprep.subr.bf16.mxu0 0
    %1517 = vmatpush1.bf16.msra.mxu0 0
    %1518 = vmatprep.subr.bf16.mxu0 0
    %1519 = vmatpush1.bf16.msra.mxu0 0
    %1520 = vmatprep.subr.bf16.mxu0 0
    %1521 = vmatpush1.bf16.msra.mxu0 0
    %1522 = vmatprep.subr.bf16.mxu0 0
    %1523 = vmatpush1.bf16.msra.mxu0 0
    %1524 = vmatprep.subr.bf16.mxu0 0
    %1525 = vmatpush1.bf16.msra.mxu0 0
    %1526 = vmatprep.subr.bf16.mxu0 0
    %1527 = vmatpush1.bf16.msra.mxu0 0
    %1528 = vmatprep.subr.bf16.mxu0 0
    %1529 = vmatpush1.bf16.msra.mxu0 0
    %1530 = vmatprep.subr.bf16.mxu0 0
    %1531 = vmatpush1.bf16.msra.mxu0 0
    %1532 = vmatprep.mubr.bf16.mxu0 0
    %1533 = vmatmul.mubr.bf16.gmra.mrb[0].mxu0 %v1385
    %v1534 = vpop.f32.mrb[0].mxu0
    %v1535 = vadd.f32 0.0, %v1534
    %v1536 = vpop.f32.mrb[0].mxu0
    %v1537 = vadd.f32 0.0, %v1536
    %v1538 = vpop.f32.mrb[0].mxu0
    %v1539 = vpop.f32.mrb[0].mxu0
    %1540 = vdwg.mxu0
    %v1541 = vadd.f32 %v192, %v1535
    %v1542 = vadd.f32 %v194, %v1537
    %v1543 = vxor.u32 %v1541, 2147483648
    %v1544 = vxor.u32 %v1542, 2147483648
    %v1545 = vmul.f32 %v1543, 1.442695
    %v1546 = vpow.pop %v1545
    %v1547 = vmul.f32 %v1544, 1.442695
    %v1548 = vpow.pop %v1547
    %v1549 = vadd.f32 %v1546, 1.0
    %v1550 = vadd.f32 %v1548, 1.0
    %v1551 = vrcp.pop %v1549
    %v1552 = vmul.f32 1.0, %v1551
    %v1553 = vrcp.pop %v1550
    %v1554 = vmul.f32 1.0, %v1553
    %v1555 = vtanh.pop %v1542
    %v1557 = vrot.slane %v1376, 4
    %v1559 = vmul.f32 %v1552, %v1557
    %v1560 = vmul.f32 %v1552, %v1555
    %1562 = vrot.lane.b32.xlu0 %v1560, 64
    %v1563 = vpop.permute.xlu0 %1562
    %v1565 = vadd.f32 %v1559, %v1563
    %v1566 = vtanh.pop %v1565
    %v1567 = vmul.f32 %v1554, %v1566
    %v1568 = vpack.c.bf16 %v1567, %v1567
    %1570 = vrot.lane.b32.xlu0 %v1568, 64
    %v1571 = vpop.permute.xlu0 %1570
    %v1573 = vsel %vm256, %v1571, 0
    %1575 = vmatprep.subr.bf16.mxu0 %v362
    %1576 = vmatpush1.bf16.msra.mxu0 %v361
    %1577 = vmatprep.subr.bf16.mxu0 %v364
    %1578 = vmatpush1.bf16.msra.mxu0 %v363
    %1579 = vmatprep.subr.bf16.mxu0 %v366
    %1580 = vmatpush1.bf16.msra.mxu0 %v365
    %1581 = vmatprep.subr.bf16.mxu0 %v368
    %1582 = vmatpush1.bf16.msra.mxu0 %v367
    %1583 = vmatprep.subr.bf16.mxu0 0
    %1584 = vmatpush1.bf16.msra.mxu0 0
    %1585 = vmatprep.subr.bf16.mxu0 0
    %1586 = vmatpush1.bf16.msra.mxu0 0
    %1587 = vmatprep.subr.bf16.mxu0 0
    %1588 = vmatpush1.bf16.msra.mxu0 0
    %1589 = vmatprep.subr.bf16.mxu0 0
    %1590 = vmatpush1.bf16.msra.mxu0 0
    %1591 = vmatprep.subr.bf16.mxu0 0
    %1592 = vmatpush1.bf16.msra.mxu0 0
    %1593 = vmatprep.subr.bf16.mxu0 0
    %1594 = vmatpush1.bf16.msra.mxu0 0
    %1595 = vmatprep.subr.bf16.mxu0 0
    %1596 = vmatpush1.bf16.msra.mxu0 0
    %1597 = vmatprep.subr.bf16.mxu0 0
    %1598 = vmatpush1.bf16.msra.mxu0 0
    %1599 = vmatprep.subr.bf16.mxu0 0
    %1600 = vmatpush1.bf16.msra.mxu0 0
    %1601 = vmatprep.subr.bf16.mxu0 0
    %1602 = vmatpush1.bf16.msra.mxu0 0
    %1603 = vmatprep.subr.bf16.mxu0 0
    %1604 = vmatpush1.bf16.msra.mxu0 0
    %1605 = vmatprep.subr.bf16.mxu0 0
    %1606 = vmatpush1.bf16.msra.mxu0 0
    %1607 = vmatprep.mubr.bf16.mxu0 0
    %1608 = vmatmul.mubr.bf16.gmra.mrb[0].mxu0 %v1573
    %v1609 = vpop.f32.mrb[0].mxu0
    %v1610 = vadd.f32 %v1494, %v1609
    %v1611 = vpop.f32.mrb[0].mxu0
    %v1612 = vadd.f32 %v1496, %v1611
    %v1613 = vpop.f32.mrb[0].mxu0
    %v1614 = vpop.f32.mrb[0].mxu0
    %1615 = vdwg.mxu0
    %v1616 = vadd.f32 %v1610, %v201
    %v1617 = vadd.f32 %v1612, %v205
    %v1618 = vxor.u32 %v1616, 2147483648
    %v1619 = vxor.u32 %v1617, 2147483648
    %v1620 = vmul.f32 %v1618, 1.442695
    %v1621 = vpow.pop %v1620
    %v1622 = vmul.f32 %v1619, 1.442695
    %v1623 = vpow.pop %v1622
    %v1624 = vadd.f32 %v1621, 1.0
    %v1625 = vadd.f32 %v1623, 1.0
    %v1626 = vrcp.pop %v1624
    %v1627 = vmul.f32 1.0, %v1626
    %v1628 = vrcp.pop %v1625
    %v1629 = vmul.f32 1.0, %v1628
    %v1630 = vtanh.pop %v1617
    %v1631 = vmul.f32 %v1627, %v1449
    %v1632 = vmul.f32 %v1627, %v1630
    %1634 = vrot.lane.b32.xlu0 %v1632, 64
    %v1635 = vpop.permute.xlu0 %1634
    %v1637 = vadd.f32 %v1631, %v1635
    %v1638 = vtanh.pop %v1637
    %v1639 = vmul.f32 %v1629, %v1638
    %v1640 = vpack.c.bf16 %v1639, %v1639
    %1642 = vrot.lane.b32.xlu0 %v1640, 64
    %v1643 = vpop.permute.xlu0 %1642
    %v1645 = vsel %vm256, %v1643, 0
    %1647 = vmatprep.subr.bf16.mxu0 %v480
    %1648 = vmatpush1.bf16.msra.mxu0 %v479
    %1649 = vmatprep.subr.bf16.mxu0 %v482
    %1650 = vmatpush1.bf16.msra.mxu0 %v481
    %1651 = vmatprep.subr.bf16.mxu0 %v484
    %1652 = vmatpush1.bf16.msra.mxu0 %v483
    %1653 = vmatprep.subr.bf16.mxu0 %v486
    %1654 = vmatpush1.bf16.msra.mxu0 %v485
    %1655 = vmatprep.subr.bf16.mxu0 0
    %1656 = vmatpush1.bf16.msra.mxu0 0
    %1657 = vmatprep.subr.bf16.mxu0 0
    %1658 = vmatpush1.bf16.msra.mxu0 0
    %1659 = vmatprep.subr.bf16.mxu0 0
    %1660 = vmatpush1.bf16.msra.mxu0 0
    %1661 = vmatprep.subr.bf16.mxu0 0
    %1662 = vmatpush1.bf16.msra.mxu0 0
    %1663 = vmatprep.subr.bf16.mxu0 0
    %1664 = vmatpush1.bf16.msra.mxu0 0
    %1665 = vmatprep.subr.bf16.mxu0 0
    %1666 = vmatpush1.bf16.msra.mxu0 0
    %1667 = vmatprep.subr.bf16.mxu0 0
    %1668 = vmatpush1.bf16.msra.mxu0 0
    %1669 = vmatprep.subr.bf16.mxu0 0
    %1670 = vmatpush1.bf16.msra.mxu0 0
    %1671 = vmatprep.subr.bf16.mxu0 0
    %1672 = vmatpush1.bf16.msra.mxu0 0
    %1673 = vmatprep.subr.bf16.mxu0 0
    %1674 = vmatpush1.bf16.msra.mxu0 0
    %1675 = vmatprep.subr.bf16.mxu0 0
    %1676 = vmatpush1.bf16.msra.mxu0 0
    %1677 = vmatprep.subr.bf16.mxu0 0
    %1678 = vmatpush1.bf16.msra.mxu0 0
    %1679 = vmatprep.mubr.bf16.mxu0 0
    %1680 = vmatmul.mubr.bf16.gmra.mrb[0].mxu0 %v1645
    %v1681 = vpop.f32.mrb[0].mxu0
    %v1682 = vadd.f32 0.0, %v1681
    %v1683 = vpop.f32.mrb[0].mxu0
    %v1684 = vadd.f32 0.0, %v1683
    %v1685 = vpop.f32.mrb[0].mxu0
    %v1686 = vpop.f32.mrb[0].mxu0
    %1687 = vdwg.mxu0
    %1688 = vmatprep.subr.bf16.mxu0 %v241
    %1689 = vmatpush1.bf16.msra.mxu0 %v240
    %1690 = vmatprep.subr.bf16.mxu0 %v243
    %1691 = vmatpush1.bf16.msra.mxu0 %v242
    %1692 = vmatprep.subr.bf16.mxu0 %v245
    %1693 = vmatpush1.bf16.msra.mxu0 %v244
    %1694 = vmatprep.subr.bf16.mxu0 %v247
    %1695 = vmatpush1.bf16.msra.mxu0 %v246
    %1696 = vmatprep.subr.bf16.mxu0 0
    %1697 = vmatpush1.bf16.msra.mxu0 0
    %1698 = vmatprep.subr.bf16.mxu0 0
    %1699 = vmatpush1.bf16.msra.mxu0 0
    %1700 = vmatprep.subr.bf16.mxu0 0
    %1701 = vmatpush1.bf16.msra.mxu0 0
    %1702 = vmatprep.subr.bf16.mxu0 0
    %1703 = vmatpush1.bf16.msra.mxu0 0
    %1704 = vmatprep.subr.bf16.mxu0 0
    %1705 = vmatpush1.bf16.msra.mxu0 0
    %1706 = vmatprep.subr.bf16.mxu0 0
    %1707 = vmatpush1.bf16.msra.mxu0 0
    %1708 = vmatprep.subr.bf16.mxu0 0
    %1709 = vmatpush1.bf16.msra.mxu0 0
    %1710 = vmatprep.subr.bf16.mxu0 0
    %1711 = vmatpush1.bf16.msra.mxu0 0
    %1712 = vmatprep.subr.bf16.mxu0 0
    %1713 = vmatpush1.bf16.msra.mxu0 0
    %1714 = vmatprep.subr.bf16.mxu0 0
    %1715 = vmatpush1.bf16.msra.mxu0 0
    %1716 = vmatprep.subr.bf16.mxu0 0
    %1717 = vmatpush1.bf16.msra.mxu0 0
    %1718 = vmatprep.subr.bf16.mxu0 0
    %1719 = vmatpush1.bf16.msra.mxu0 0
    %1720 = vmatprep.mubr.bf16.mxu0 0
    %1721 = vmatmul.mubr.bf16.gmra.mrb[0].mxu0 %v1573
    %v1722 = vpop.f32.mrb[0].mxu0
    %v1723 = vadd.f32 0.0, %v1722
    %v1724 = vpop.f32.mrb[0].mxu0
    %v1725 = vadd.f32 0.0, %v1724
    %v1726 = vpop.f32.mrb[0].mxu0
    %v1727 = vpop.f32.mrb[0].mxu0
    %1728 = vdwg.mxu0
    %v1731 = vrot.slane %v1723, 4
    %v1732 = vrot.slane %v1725, 4
    %v1735 = vadd.f32 %v192, %v1731
    %v1736 = vadd.f32 %v194, %v1732
    %v1737 = vxor.u32 %v1735, 2147483648
    %v1738 = vxor.u32 %v1736, 2147483648
    %v1739 = vmul.f32 %v1737, 1.442695
    %v1740 = vpow.pop %v1739
    %v1741 = vmul.f32 %v1738, 1.442695
    %v1742 = vpow.pop %v1741
    %v1743 = vadd.f32 %v1740, 1.0
    %v1744 = vadd.f32 %v1742, 1.0
    %v1745 = vrcp.pop %v1743
    %v1746 = vmul.f32 1.0, %v1745
    %v1747 = vrcp.pop %v1744
    %v1748 = vmul.f32 1.0, %v1747
    %v1749 = vtanh.pop %v1736
    %v1751 = vrot.slane %v1565, 4
    %v1753 = vmul.f32 %v1746, %v1751
    %v1754 = vmul.f32 %v1746, %v1749
    %1756 = vrot.lane.b32.xlu0 %v1754, 64
    %v1757 = vpop.permute.xlu0 %1756
    %v1759 = vadd.f32 %v1753, %v1757
    %v1760 = vtanh.pop %v1759
    %v1761 = vmul.f32 %v1748, %v1760
    %v1762 = vpack.c.bf16 %v1761, %v1761
    %v1764 = vrot.slane %v1762, 2
    %1765 = vrot.lane.b32.xlu0 %v1764, 64
    %v1766 = vpop.permute.xlu0 %1765
    %v1768 = vsel %vm256, %v1766, 0
    %1770 = vmatprep.subr.bf16.mxu0 %v362
    %1771 = vmatpush1.bf16.msra.mxu0 %v361
    %1772 = vmatprep.subr.bf16.mxu0 %v364
    %1773 = vmatpush1.bf16.msra.mxu0 %v363
    %1774 = vmatprep.subr.bf16.mxu0 %v366
    %1775 = vmatpush1.bf16.msra.mxu0 %v365
    %1776 = vmatprep.subr.bf16.mxu0 %v368
    %1777 = vmatpush1.bf16.msra.mxu0 %v367
    %1778 = vmatprep.subr.bf16.mxu0 0
    %1779 = vmatpush1.bf16.msra.mxu0 0
    %1780 = vmatprep.subr.bf16.mxu0 0
    %1781 = vmatpush1.bf16.msra.mxu0 0
    %1782 = vmatprep.subr.bf16.mxu0 0
    %1783 = vmatpush1.bf16.msra.mxu0 0
    %1784 = vmatprep.subr.bf16.mxu0 0
    %1785 = vmatpush1.bf16.msra.mxu0 0
    %1786 = vmatprep.subr.bf16.mxu0 0
    %1787 = vmatpush1.bf16.msra.mxu0 0
    %1788 = vmatprep.subr.bf16.mxu0 0
    %1789 = vmatpush1.bf16.msra.mxu0 0
    %1790 = vmatprep.subr.bf16.mxu0 0
    %1791 = vmatpush1.bf16.msra.mxu0 0
    %1792 = vmatprep.subr.bf16.mxu0 0
    %1793 = vmatpush1.bf16.msra.mxu0 0
    %1794 = vmatprep.subr.bf16.mxu0 0
    %1795 = vmatpush1.bf16.msra.mxu0 0
    %1796 = vmatprep.subr.bf16.mxu0 0
    %1797 = vmatpush1.bf16.msra.mxu0 0
    %1798 = vmatprep.subr.bf16.mxu0 0
    %1799 = vmatpush1.bf16.msra.mxu0 0
    %1800 = vmatprep.subr.bf16.mxu0 0
    %1801 = vmatpush1.bf16.msra.mxu0 0
    %1802 = vmatprep.mubr.bf16.mxu0 0
    %1803 = vmatmul.mubr.bf16.gmra.mrb[0].mxu0 %v1768
    %v1804 = vpop.f32.mrb[0].mxu0
    %v1805 = vadd.f32 %v1682, %v1804
    %v1806 = vpop.f32.mrb[0].mxu0
    %v1807 = vadd.f32 %v1684, %v1806
    %v1808 = vpop.f32.mrb[0].mxu0
    %v1809 = vpop.f32.mrb[0].mxu0
    %1810 = vdwg.mxu0
    %v1811 = vadd.f32 %v1805, %v201
    %v1812 = vadd.f32 %v1807, %v205
    %v1813 = vxor.u32 %v1811, 2147483648
    %v1814 = vxor.u32 %v1812, 2147483648
    %v1815 = vmul.f32 %v1813, 1.442695
    %v1816 = vpow.pop %v1815
    %v1817 = vmul.f32 %v1814, 1.442695
    %v1818 = vpow.pop %v1817
    %v1819 = vadd.f32 %v1816, 1.0
    %v1820 = vadd.f32 %v1818, 1.0
    %v1821 = vrcp.pop %v1819
    %v1822 = vmul.f32 1.0, %v1821
    %v1823 = vrcp.pop %v1820
    %v1824 = vmul.f32 1.0, %v1823
    %v1825 = vtanh.pop %v1812
    %v1826 = vmul.f32 %v1822, %v1637
    %v1827 = vmul.f32 %v1822, %v1825
    %1829 = vrot.lane.b32.xlu0 %v1827, 64
    %v1830 = vpop.permute.xlu0 %1829
    %v1832 = vadd.f32 %v1826, %v1830
    %v1833 = vtanh.pop %v1832
    %v1834 = vmul.f32 %v1824, %v1833
    %v1835 = vpack.c.bf16 %v1834, %v1834
    %v1836 = vld [vmem:[%s7] sm:$0xf]
    %v1837 = vld [vmem:[%s7 + $0x4] sm:$0xf]
    %v1838 = vld [vmem:[%s7 + $0x8] sm:$0xf]
    %v1839 = vld [vmem:[%s7 + $0xc] sm:$0xf]
    %v1840 = vld [vmem:[%s7 + $0x10] sm:$0xf]
    %v1841 = vld [vmem:[%s7 + $0x14] sm:$0xf]
    %v1842 = vld [vmem:[%s7 + $0x18] sm:$0xf]
    %v1843 = vld [vmem:[%s7 + $0x1c] sm:$0xf]
    %v1844 = vld [vmem:[#allocation10] sm:$0x1]
    %v1846 = vlaneseq
    %v1847 = vshrl.u32 %v1846, 7
    %v1848 = vsub.s32 0, %v1847
    %v1849 = vrot.slane %v1844, %v1848
    %1852 = vrot.lane.b32.xlu0 %v1835, 64
    %v1853 = vpop.permute.xlu0 %1852
    %v1862 = vunpack.c.l.b16 %v1836
    %v1863 = vunpack.c.l.b16 %v1837
    %v1864 = vunpack.c.l.b16 %v1838
    %v1865 = vunpack.c.l.b16 %v1839
    %v1866 = vunpack.c.l.b16 %v1840
    %v1867 = vunpack.c.l.b16 %v1841
    %v1868 = vunpack.c.l.b16 %v1842
    %v1869 = vunpack.c.l.b16 %v1843
    %v1870 = vpack.c.b16 %v1863, %v1862
    %v1871 = vpack.c.b16 %v1865, %v1864
    %v1872 = vpack.c.b16 %v1867, %v1866
    %v1873 = vpack.c.b16 %v1869, %v1868
    %v1879 = vsel %vm256, %v1853, 0
    %1881 = vmatprep.subr.bf16.mxu0 0
    %1882 = vmatpush1.bf16.msra.mxu0 %v1870
    %1883 = vmatprep.subr.bf16.mxu0 0
    %1884 = vmatpush1.bf16.msra.mxu0 %v1871
    %1885 = vmatprep.subr.bf16.mxu0 0
    %1886 = vmatpush1.bf16.msra.mxu0 %v1872
    %1887 = vmatprep.subr.bf16.mxu0 0
    %1888 = vmatpush1.bf16.msra.mxu0 %v1873
    %1889 = vmatprep.subr.bf16.mxu0 0
    %1890 = vmatpush1.bf16.msra.mxu0 0
    %1891 = vmatprep.subr.bf16.mxu0 0
    %1892 = vmatpush1.bf16.msra.mxu0 0
    %1893 = vmatprep.subr.bf16.mxu0 0
    %1894 = vmatpush1.bf16.msra.mxu0 0
    %1895 = vmatprep.subr.bf16.mxu0 0
    %1896 = vmatpush1.bf16.msra.mxu0 0
    %1897 = vmatprep.subr.bf16.mxu0 0
    %1898 = vmatpush1.bf16.msra.mxu0 0
    %1899 = vmatprep.subr.bf16.mxu0 0
    %1900 = vmatpush1.bf16.msra.mxu0 0
    %1901 = vmatprep.subr.bf16.mxu0 0
    %1902 = vmatpush1.bf16.msra.mxu0 0
    %1903 = vmatprep.subr.bf16.mxu0 0
    %1904 = vmatpush1.bf16.msra.mxu0 0
    %1905 = vmatprep.subr.bf16.mxu0 0
    %1906 = vmatpush1.bf16.msra.mxu0 0
    %1907 = vmatprep.subr.bf16.mxu0 0
    %1908 = vmatpush1.bf16.msra.mxu0 0
    %1909 = vmatprep.subr.bf16.mxu0 0
    %1910 = vmatpush1.bf16.msra.mxu0 0
    %1911 = vmatprep.subr.bf16.mxu0 0
    %1912 = vmatpush1.bf16.msra.mxu0 0
    %1913 = vmatprep.mubr.bf16.mxu0 0
    %1914 = vmatmul.mubr.bf16.gmra.mrb[0].mxu0 %v1879
    %v1915 = vpop.f32.mrb[0].mxu0
    %v1916 = vadd.f32 %v1849, %v1915
    %v1917 = vpop.f32.mrb[0].mxu0
    %v1918 = vpop.f32.mrb[0].mxu0
    %v1919 = vpop.f32.mrb[0].mxu0
    %1920 = vdwg.mxu0
    %v1921 = vmax.f32 %v1916, 0.0
    %1922 = vst [vmem:[#allocation11] sm:$0xf] %v1921
    // Predicated region
    $region58: #{rnn_for_stacked_features.1} parent=1 // pred_check
      _
    $region59: #{rnn_for_stacked_features.1} parent=1 // pred_check_branch
      %1924 = sbr.rel (0) target = $region61
    $region60: #{rnn_for_stacked_features.1} parent=1 // pred_region
      %s1926 = ssub.s32 64, 64
      %1927 = vsyncadd [#allocation4], %s1926
      %s1929 = sshll.u32 [#allocation11], 4
      %s1930 = int_to_ptr.vmem [resolvable:$true] %s1929
      %1932 = dma.vmem_to_hbm [thread:$0]  %s1930, 64, %s9, [#allocation4]
    $region61: #{rnn_for_stacked_features.1} parent=1 // pred_fallthru
      _
    // Predicated region
    $region62: #{rnn_for_stacked_features.1} parent=1 // pred_check
      _
    $region63: #{rnn_for_stacked_features.1} parent=1 // pred_check_branch
      %1934 = sbr.rel (0) target = $region65
    $region64: #{rnn_for_stacked_features.1} parent=1 // pred_region
      %1935 = dma.done [#allocation4], 64
    $region65: #{rnn_for_stacked_features.1} parent=1 // pred_fallthru
      _
    %1936 = vsyncpa [#allocation3], 1
    %1937 = vsyncpa [#allocation6], 1
    %1938 = vsyncpa [#allocation9], 1
    %1939 = vsyncpa [#allocation4], 1

</llo_original>
